<compile_context>
chip_gen: v7x
topology: tpu7x:2x2x1
jax: 0.10.0
libtpu: 0.0.40
codegen_flags: <defaults>
</compile_context>

<pallas_src>
import math
import functools

import numpy as np
import jax
import jax.numpy as jnp
from jax import lax
from jax.experimental import pallas as pl
from jax.experimental.pallas import tpu as pltpu


def _round_up(x: int, m: int) -> int:
    return ((x + m - 1) // m) * m


def _nearest_src_indices(out_size: int, in_size: int, scale_factor: float) -> np.ndarray:
    # torch.nn.functional.interpolate(mode='nearest', scale_factor=sf):
    #   src = min(floor(dst / sf), in_size - 1)
    dst = np.arange(out_size, dtype=np.float64)
    src = np.floor(dst / float(scale_factor)).astype(np.int64)
    return np.minimum(src, max(in_size - 1, 0))


def _vmem_block_bytes(rows: int, cols: int, dtype) -> int:
    """Padded ((8|16|32), 128)-tiled VMEM footprint of a 2-D tile."""
    b = int(np.dtype(dtype).itemsize)
    sub = max(8, 32 // max(b, 1))
    return _round_up(max(int(rows), 1), sub) * _round_up(max(int(cols), 1), 128) * b


def _rpc_kernel(img_ref, r_ref, ct_ref, out_ref, *, tb, s0, s1, s1p, chunk,
                row_lo, row_hi, col_lo, col_hi, pad_value, apply_pad,
                compute_dtype, needs_cast):
    # img_ref : (TB, H, W)   current batch of image planes
    # r_ref   : (S0p, H)     row one-hot selection matrix (zero row  => pad row)
    # ct_ref  : (W, S1p)     col one-hot selection matrix (zero col  => pad col)
    # out_ref : (TB, S0, S1) exact final output block (no wrapper-side crop)
    r_mat = r_ref[...]                                             # (S0p, H)

    for t in range(tb):                                            # static unroll, TB <= 32
        x_t = img_ref[t]                                           # (H, W)
        if needs_cast:
            x_t = x_t.astype(compute_dtype)
        sel = jnp.dot(r_mat, x_t, preferred_element_type=jnp.float32)   # (S0p, W) f32
        sel = sel.astype(compute_dtype)

        # Column selection, chunked along S1p to bound the live f32 accumulator.
        for c0 in range(0, s1p, chunk):
            if c0 >= s1:                                           # never stored -> skip
                break
            cw = min(chunk, s1p - c0)                              # lane-aligned matmul N
            sw = min(cw, s1 - c0)                                  # stored width
            y = jnp.dot(sel, ct_ref[:, c0:c0 + cw],
                        preferred_element_type=jnp.float32)        # (S0p, cw) f32
            if apply_pad:
                rows = lax.broadcasted_iota(jnp.int32, y.shape, 0)
                cols = lax.broadcasted_iota(jnp.int32, y.shape, 1) + c0
                ok = ((rows >= row_lo) & (rows < row_hi)
                      & (cols >= col_lo) & (cols < col_hi))
                y = jnp.where(ok, y, jnp.float32(pad_value))
            out_ref[t, :, c0:c0 + sw] = y[:s0, :sw].astype(out_ref.dtype)


def resize_pad_crop(img, *, scale_factor=1.0, scaled_image_size=None,
                    pad_mode="constant", pad_value=0.0,
                    pad_position=("bottom", "right")):
    """JAX/Pallas equivalent of ResizePadCrop.forward for 4-D NCHW input."""
    assert pad_mode == "constant"  # TODO(synk): only 'constant' pad_mode implemented
    assert pad_position[0] in ("top", "bottom")
    assert pad_position[1] in ("left", "right")

    N, C, H, W = img.shape
    H_r = int(math.floor(H * float(scale_factor)))
    W_r = int(math.floor(W * float(scale_factor)))

    if scaled_image_size is None:
        S0, S1 = H_r, W_r
    else:
        S0, S1 = int(scaled_image_size[0]), int(scaled_image_size[1])

    h_src = _nearest_src_indices(H_r, H, scale_factor)
    w_src = _nearest_src_indices(W_r, W, scale_factor)

    # Static per-output-row / per-output-column source indices (-1 == padded).
    row_src = np.full((S0,), -1, dtype=np.int64)
    col_src = np.full((S1,), -1, dtype=np.int64)
    if scaled_image_size is None:
        row_src[:] = h_src
        col_src[:] = w_src
    else:
        # Height: pad top/bottom, then crop (matches the PyTorch code path exactly).
        if pad_position[0] == "bottom":
            offset = max(H_r - S0, 0)               # pad bottom, take LAST S0 rows
            for oh in range(S0):
                p = oh + offset
                if p < H_r:
                    row_src[oh] = h_src[p]
        else:                                       # 'top': pad top, take FIRST S0 rows
            pad_tb = max(0, S0 - H_r)
            for oh in range(S0):
                p = oh - pad_tb
                if 0 <= p < H_r:
                    row_src[oh] = h_src[p]
        # Width: the reference code always crops the FIRST S1 columns.
        if pad_position[1] == "right":
            for ow in range(S1):
                if ow < W_r:
                    col_src[ow] = w_src[ow]
        else:                                       # 'left'
            pad_lr = max(0, S1 - W_r)
            for ow in range(S1):
                p = ow - pad_lr
                if 0 <= p < W_r:
                    col_src[ow] = w_src[p]

    # Valid region is a contiguous rectangle -> static scalar bounds for the pad mask.
    vr = np.nonzero(row_src >= 0)[0]
    vc = np.nonzero(col_src >= 0)[0]
    row_lo, row_hi = (int(vr[0]), int(vr[-1]) + 1) if vr.size else (0, 0)
    col_lo, col_hi = (int(vc[0]), int(vc[-1]) + 1) if vc.size else (0, 0)
    has_pad_cells = (row_lo > 0) or (row_hi < S0) or (col_lo > 0) or (col_hi < S1)
    apply_pad = has_pad_cells and (float(pad_value) != 0.0)  # matmul already yields 0 at pads

    # ---- dtype gating: bf16 one-hot matmuls are exact; f32 for everything else. ----
    if img.dtype == jnp.bfloat16:
        compute_dtype = jnp.bfloat16
        sub_align = 16
    else:
        compute_dtype = jnp.float32
        sub_align = 8
    needs_cast = (img.dtype != compute_dtype)

    # Aligned internal dims (matmul tiles); the output itself is stored un-padded.
    S0p = _round_up(max(S0, 1), sub_align)
    S1p = _round_up(max(S1, 1), 128)

    # One-hot selection matrices (static, 0/1 exact in bf16).
    R_np = np.zeros((S0p, H), dtype=np.float32)
    for oh in range(S0):
        if row_src[oh] >= 0:
            R_np[oh, row_src[oh]] = 1.0
    Ct_np = np.zeros((W, S1p), dtype=np.float32)
    for ow in range(S1):
        if col_src[ow] >= 0:
            Ct_np[col_src[ow], ow] = 1.0
    R = jnp.asarray(R_np, dtype=compute_dtype)
    Ct = jnp.asarray(Ct_np, dtype=compute_dtype)

    # ---- column-chunk size: keep the live f32 accumulator <= ~2 MiB, lane aligned ----
    chunk = 128
    for c in (512, 256, 128):
        if S0p * c * 4 <= (2 << 20) or c == 128:
            chunk = c
            break
    chunk = min(chunk, S1p)

    # ---- VMEM-budgeted batching over (N*C) image planes ----
    B = N * C
    try:
        vmem_cap = int(pltpu.get_tpu_info().vmem_capacity_bytes)
    except Exception:
        vmem_cap = 64 * 1024 * 1024                 # conservative (v7x per-TC) fallback
    budget = int(0.75 * vmem_cap)                   # headroom for compiler scratch
    vmem_limit = budget

    per_plane = (2 * _vmem_block_bytes(H, W, img.dtype)        # double-buffered input
                 + 2 * _vmem_block_bytes(S0, S1, img.dtype))   # double-buffered output
    fixed = (2 * _vmem_block_bytes(S0p, H, compute_dtype)      # R (assume 2 bufs)
             + 2 * _vmem_block_bytes(W, S1p, compute_dtype)    # Ct (assume 2 bufs)
             + _vmem_block_bytes(S0p, W, jnp.float32)          # live row-selected value
             + _vmem_block_bytes(S0p, W, compute_dtype)
             + 2 * _vmem_block_bytes(S0p, chunk, jnp.float32)  # live output chunk
             + (4 << 20))                                      # slack
    tb_budget = max(1, (budget - fixed) // max(per_plane, 1))
    upper = int(min(tb_budget, 32, B // 2)) if B >= 2 else 1   # >=2 steps, bounded unroll
    upper = max(upper, 1)
    divs = [d for d in range(1, upper + 1) if B % d == 0]      # TB | B -> no input padding
    even = [d for d in divs if (B // d) % 2 == 0]              # prefer even #steps (v7x)
    TB = max(even) if even else max(divs)
    n_steps = B // TB

    x3 = img.reshape(B, H, W)                                  # metadata-only reshape

    kernel = functools.partial(
        _rpc_kernel, tb=TB, s0=S0, s1=S1, s1p=S1p, chunk=chunk,
        row_lo=row_lo, row_hi=row_hi, col_lo=col_lo, col_hi=col_hi,
        pad_value=float(pad_value), apply_pad=apply_pad,
        compute_dtype=compute_dtype, needs_cast=needs_cast)

    def _make_call(single_buffer_consts: bool):
        const_kw = {"pipeline_mode": pl.Buffered(1)} if single_buffer_consts else {}
        in_specs = [
            pl.BlockSpec((TB, H, W), lambda b: (b, 0, 0)),
            pl.BlockSpec((S0p, H), lambda b: (0, 0), **const_kw),
            pl.BlockSpec((W, S1p), lambda b: (0, 0), **const_kw),
        ]
        return pl.pallas_call(
            kernel,
            out_shape=jax.ShapeDtypeStruct((B, S0, S1), img.dtype),
            grid_spec=pltpu.PrefetchScalarGridSpec(
                num_scalar_prefetch=0,
                grid=(n_steps,),
                in_specs=in_specs,
                out_specs=pl.BlockSpec((TB, S0, S1), lambda b: (b, 0, 0)),
            ),
            compiler_params=pltpu.CompilerParams(
                dimension_semantics=("parallel",),
                vmem_limit_bytes=vmem_limit,
            ),
        )

    try:
        # Grid-constant operands: single-buffered (they are DMA'd once anyway).
        out3 = _make_call(True)(x3, R, Ct)
    except Exception:
        # Fallback: this jax version rejects pl.Buffered(1) -> default double buffering.
        out3 = _make_call(False)(x3, R, Ct)

    return out3.reshape(N, C, S0, S1)                           # metadata-only reshape


def _reference_numpy(img, scale_factor, scaled_image_size, pad_value,
                     pad_position=("bottom", "right")):
    """Pure-numpy replica of the PyTorch forward (including its crop quirks)."""
    x = np.asarray(img)
    N, C, H, W = x.shape
    H_r = int(math.floor(H * float(scale_factor)))
    W_r = int(math.floor(W * float(scale_factor)))
    rs = _nearest_src_indices(H_r, H, scale_factor)
    cs = _nearest_src_indices(W_r, W, scale_factor)
    res = x[:, :, rs][:, :, :, cs]
    if scaled_image_size is None:
        return res
    S0, S1 = scaled_image_size
    pad_tb = max(0, S0 - H_r)
    pad_lr = max(0, S1 - W_r)
    pad_top = pad_tb if pad_position[0] == "top" else 0
    pad_bot = pad_tb if pad_position[0] == "bottom" else 0
    pad_left = pad_lr if pad_position[1] == "left" else 0
    pad_right = pad_lr if pad_position[1] == "right" else 0
    padded = np.pad(res, ((0, 0), (0, 0), (pad_top, pad_bot), (pad_left, pad_right)),
                    mode="constant", constant_values=pad_value)
    # Reference module checks pad_position[0]=='left' (never true) -> always first S1 cols.
    padded = padded[..., :S1]
    if pad_position[0] == "bottom":
        return padded[..., -S0:, :]
    return padded[..., :S0, :]


if __name__ == "__main__":
    key = jax.random.PRNGKey(0)
    N, C, H, W = 2, 4, 16, 16
    img = jax.random.normal(key, (N, C, H, W), dtype=jnp.float32)

    # Case 1: f32, 2x upscale, pad bottom (32 -> 40), crop width (32 -> 24), pad_value=-1.
    out = resize_pad_crop(img, scale_factor=2.0, scaled_image_size=(40, 24),
                          pad_mode="constant", pad_value=-1.0,
                          pad_position=("bottom", "right"))
    out = jax.block_until_ready(out)
    ref = _reference_numpy(np.asarray(img), 2.0, (40, 24), -1.0, ("bottom", "right"))
    assert out.shape == (N, C, 40, 24), out.shape
    np.testing.assert_allclose(np.asarray(out), ref, rtol=1e-5, atol=1e-5)

    # Case 2: bf16 fast path (one-hot selection is exact in bf16).
    img_bf16 = img.astype(jnp.bfloat16)
    out_bf = resize_pad_crop(img_bf16, scale_factor=2.0, scaled_image_size=(40, 24),
                             pad_value=-1.0, pad_position=("bottom", "right"))
    out_bf = jax.block_until_ready(out_bf)
    ref_bf = _reference_numpy(np.asarray(img_bf16.astype(jnp.float32)),
                              2.0, (40, 24), -1.0, ("bottom", "right"))
    np.testing.assert_allclose(np.asarray(out_bf.astype(jnp.float32)), ref_bf,
                               rtol=1e-2, atol=1e-2)

    # Case 3: resize only (scaled_image_size=None -> no pad, no crop).
    out_r = jax.block_until_ready(resize_pad_crop(img, scale_factor=2.0))
    ref_r = _reference_numpy(np.asarray(img), 2.0, None, 0.0)
    np.testing.assert_allclose(np.asarray(out_r), ref_r, rtol=1e-5, atol=1e-5)

    # Case 4: ('top', 'left') with real top and left padding, nonzero pad value.
    out_tl = jax.block_until_ready(
        resize_pad_crop(img, scale_factor=2.0, scaled_image_size=(40, 48),
                        pad_value=2.5, pad_position=("top", "left")))
    ref_tl = _reference_numpy(np.asarray(img), 2.0, (40, 48), 2.5, ("top", "left"))
    np.testing.assert_allclose(np.asarray(out_tl), ref_tl, rtol=1e-5, atol=1e-5)

    print("KERNEL_OK")
</pallas_src>

<mosaic_0001>
module attributes {stable_mosaic.version = 11 : i64} {
  func.func @_rpc_kernel(%arg0: i32, %arg1: memref<4x16x16xf32, #tpu.memory_space<vmem>>, %arg2: memref<40x16xf32, #tpu.memory_space<vmem>>, %arg3: memref<16x128xf32, #tpu.memory_space<vmem>>, %arg4: memref<4x40x24xf32, #tpu.memory_space<vmem>>) attributes {dimension_semantics = [#tpu.dimension_semantics<parallel>], iteration_bounds = array<i64: 2>, scalar_prefetch = 0 : i64, scratch_operands = 0 : i64, tpu.core_type = #tpu.core_type<tc>, window_params = [{transform_indices = @transform_0, window_bounds = array<i64: 4, 16, 16>}, {pipeline_mode = #tpu.pipeline_mode<synchronous>, transform_indices = @transform_1, window_bounds = array<i64: 40, 16>}, {pipeline_mode = #tpu.pipeline_mode<synchronous>, transform_indices = @transform_2, window_bounds = array<i64: 16, 128>}, {transform_indices = @transform_3, window_bounds = array<i64: 4, 40, 24>}]} {
    %c0 = arith.constant 0 : index
    %c0_0 = arith.constant 0 : index
    %0 = vector.load %arg2[%c0, %c0_0] : memref<40x16xf32, #tpu.memory_space<vmem>>, vector<40x16xf32>
    %c0_1 = arith.constant 0 : index
    %c0_2 = arith.constant 0 : index
    %c0_3 = arith.constant 0 : index
    %1 = vector.load %arg1[%c0_1, %c0_2, %c0_3] : memref<4x16x16xf32, #tpu.memory_space<vmem>>, vector<1x16x16xf32>
    %2 = vector.shape_cast %1 : vector<1x16x16xf32> to vector<16x16xf32>
    %cst = arith.constant dense<0.000000e+00> : vector<40x16xf32>
    %3 = tpu.matmul %0, %2, %cst {dimension_numbers = #tpu.dot_dimension_numbers<[1], [0], [0], [1], [0, 0, 1, 1], [], []>} : vector<40x16xf32>, vector<16x16xf32>, vector<40x16xf32> -> vector<40x16xf32>
    %c0_4 = arith.constant 0 : index
    %c0_5 = arith.constant 0 : index
    %4 = vector.load %arg3[%c0_4, %c0_5] : memref<16x128xf32, #tpu.memory_space<vmem>>, vector<16x128xf32>
    %cst_6 = arith.constant dense<0.000000e+00> : vector<40x128xf32>
    %5 = tpu.matmul %3, %4, %cst_6 {dimension_numbers = #tpu.dot_dimension_numbers<[1], [0], [0], [1], [0, 0, 1, 1], [], []>} : vector<40x16xf32>, vector<16x128xf32>, vector<40x128xf32> -> vector<40x128xf32>
    %6 = tpu.iota {dimensions = array<i32: 0>} : vector<40x128xi32>
    %7 = tpu.iota {dimensions = array<i32: 1>} : vector<40x128xi32>
    %c0_i32 = arith.constant 0 : i32
    %8 = vector.broadcast %c0_i32 : i32 to vector<40x128xi32>
    %9 = arith.addi %7, %8 : vector<40x128xi32>
    %c0_i32_7 = arith.constant 0 : i32
    %10 = vector.broadcast %c0_i32_7 : i32 to vector<40x128xi32>
    %11 = arith.cmpi sge, %6, %10 : vector<40x128xi32>
    %c32_i32 = arith.constant 32 : i32
    %12 = vector.broadcast %c32_i32 : i32 to vector<40x128xi32>
    %13 = arith.cmpi slt, %6, %12 : vector<40x128xi32>
    %14 = arith.andi %11, %13 : vector<40x128xi1>
    %c0_i32_8 = arith.constant 0 : i32
    %15 = vector.broadcast %c0_i32_8 : i32 to vector<40x128xi32>
    %16 = arith.cmpi sge, %9, %15 : vector<40x128xi32>
    %17 = arith.andi %14, %16 : vector<40x128xi1>
    %c24_i32 = arith.constant 24 : i32
    %18 = vector.broadcast %c24_i32 : i32 to vector<40x128xi32>
    %19 = arith.cmpi slt, %9, %18 : vector<40x128xi32>
    %20 = arith.andi %17, %19 : vector<40x128xi1>
    %cst_9 = arith.constant -1.000000e+00 : f32
    %21 = vector.broadcast %cst_9 : f32 to vector<40x128xf32>
    %22 = arith.select %20, %5, %21 : vector<40x128xi1>, vector<40x128xf32>
    %23 = vector.extract_strided_slice %22 {offsets = [0, 0], sizes = [40, 24], strides = [1, 1]} : vector<40x128xf32> to vector<40x24xf32>
    %c0_10 = arith.constant 0 : index
    %c0_11 = arith.constant 0 : index
    %c0_12 = arith.constant 0 : index
    %24 = vector.load %arg4[%c0_10, %c0_11, %c0_12] : memref<4x40x24xf32, #tpu.memory_space<vmem>>, vector<1x40x24xf32>
    %25 = vector.shape_cast %24 : vector<1x40x24xf32> to vector<40x24xf32>
    %26 = vector.shape_cast %23 : vector<40x24xf32> to vector<1x40x24xf32>
    tpu.vector_store %arg4[%c0_10, %c0_11, %c0_12], %26 {strides = array<i32>} : memref<4x40x24xf32, #tpu.memory_space<vmem>>, vector<1x40x24xf32>,
    %c1 = arith.constant 1 : index
    %c0_13 = arith.constant 0 : index
    %c0_14 = arith.constant 0 : index
    %27 = vector.load %arg1[%c1, %c0_13, %c0_14] : memref<4x16x16xf32, #tpu.memory_space<vmem>>, vector<1x16x16xf32>
    %28 = vector.shape_cast %27 : vector<1x16x16xf32> to vector<16x16xf32>
    %cst_15 = arith.constant dense<0.000000e+00> : vector<40x16xf32>
    %29 = tpu.matmul %0, %28, %cst_15 {dimension_numbers = #tpu.dot_dimension_numbers<[1], [0], [0], [1], [0, 0, 1, 1], [], []>} : vector<40x16xf32>, vector<16x16xf32>, vector<40x16xf32> -> vector<40x16xf32>
    %c0_16 = arith.constant 0 : index
    %c0_17 = arith.constant 0 : index
    %30 = vector.load %arg3[%c0_16, %c0_17] : memref<16x128xf32, #tpu.memory_space<vmem>>, vector<16x128xf32>
    %cst_18 = arith.constant dense<0.000000e+00> : vector<40x128xf32>
    %31 = tpu.matmul %29, %30, %cst_18 {dimension_numbers = #tpu.dot_dimension_numbers<[1], [0], [0], [1], [0, 0, 1, 1], [], []>} : vector<40x16xf32>, vector<16x128xf32>, vector<40x128xf32> -> vector<40x128xf32>
    %32 = tpu.iota {dimensions = array<i32: 0>} : vector<40x128xi32>
    %33 = tpu.iota {dimensions = array<i32: 1>} : vector<40x128xi32>
    %c0_i32_19 = arith.constant 0 : i32
    %34 = vector.broadcast %c0_i32_19 : i32 to vector<40x128xi32>
    %35 = arith.addi %33, %34 : vector<40x128xi32>
    %c0_i32_20 = arith.constant 0 : i32
    %36 = vector.broadcast %c0_i32_20 : i32 to vector<40x128xi32>
    %37 = arith.cmpi sge, %32, %36 : vector<40x128xi32>
    %c32_i32_21 = arith.constant 32 : i32
    %38 = vector.broadcast %c32_i32_21 : i32 to vector<40x128xi32>
    %39 = arith.cmpi slt, %32, %38 : vector<40x128xi32>
    %40 = arith.andi %37, %39 : vector<40x128xi1>
    %c0_i32_22 = arith.constant 0 : i32
    %41 = vector.broadcast %c0_i32_22 : i32 to vector<40x128xi32>
    %42 = arith.cmpi sge, %35, %41 : vector<40x128xi32>
    %43 = arith.andi %40, %42 : vector<40x128xi1>
    %c24_i32_23 = arith.constant 24 : i32
    %44 = vector.broadcast %c24_i32_23 : i32 to vector<40x128xi32>
    %45 = arith.cmpi slt, %35, %44 : vector<40x128xi32>
    %46 = arith.andi %43, %45 : vector<40x128xi1>
    %cst_24 = arith.constant -1.000000e+00 : f32
    %47 = vector.broadcast %cst_24 : f32 to vector<40x128xf32>
    %48 = arith.select %46, %31, %47 : vector<40x128xi1>, vector<40x128xf32>
    %49 = vector.extract_strided_slice %48 {offsets = [0, 0], sizes = [40, 24], strides = [1, 1]} : vector<40x128xf32> to vector<40x24xf32>
    %c1_25 = arith.constant 1 : index
    %c0_26 = arith.constant 0 : index
    %c0_27 = arith.constant 0 : index
    %50 = vector.load %arg4[%c1_25, %c0_26, %c0_27] : memref<4x40x24xf32, #tpu.memory_space<vmem>>, vector<1x40x24xf32>
    %51 = vector.shape_cast %50 : vector<1x40x24xf32> to vector<40x24xf32>
    %52 = vector.shape_cast %49 : vector<40x24xf32> to vector<1x40x24xf32>
    tpu.vector_store %arg4[%c1_25, %c0_26, %c0_27], %52 {strides = array<i32>} : memref<4x40x24xf32, #tpu.memory_space<vmem>>, vector<1x40x24xf32>,
    %c2 = arith.constant 2 : index
    %c0_28 = arith.constant 0 : index
    %c0_29 = arith.constant 0 : index
    %53 = vector.load %arg1[%c2, %c0_28, %c0_29] : memref<4x16x16xf32, #tpu.memory_space<vmem>>, vector<1x16x16xf32>
    %54 = vector.shape_cast %53 : vector<1x16x16xf32> to vector<16x16xf32>
    %cst_30 = arith.constant dense<0.000000e+00> : vector<40x16xf32>
    %55 = tpu.matmul %0, %54, %cst_30 {dimension_numbers = #tpu.dot_dimension_numbers<[1], [0], [0], [1], [0, 0, 1, 1], [], []>} : vector<40x16xf32>, vector<16x16xf32>, vector<40x16xf32> -> vector<40x16xf32>
    %c0_31 = arith.constant 0 : index
    %c0_32 = arith.constant 0 : index
    %56 = vector.load %arg3[%c0_31, %c0_32] : memref<16x128xf32, #tpu.memory_space<vmem>>, vector<16x128xf32>
    %cst_33 = arith.constant dense<0.000000e+00> : vector<40x128xf32>
    %57 = tpu.matmul %55, %56, %cst_33 {dimension_numbers = #tpu.dot_dimension_numbers<[1], [0], [0], [1], [0, 0, 1, 1], [], []>} : vector<40x16xf32>, vector<16x128xf32>, vector<40x128xf32> -> vector<40x128xf32>
    %58 = tpu.iota {dimensions = array<i32: 0>} : vector<40x128xi32>
    %59 = tpu.iota {dimensions = array<i32: 1>} : vector<40x128xi32>
    %c0_i32_34 = arith.constant 0 : i32
    %60 = vector.broadcast %c0_i32_34 : i32 to vector<40x128xi32>
    %61 = arith.addi %59, %60 : vector<40x128xi32>
    %c0_i32_35 = arith.constant 0 : i32
    %62 = vector.broadcast %c0_i32_35 : i32 to vector<40x128xi32>
    %63 = arith.cmpi sge, %58, %62 : vector<40x128xi32>
    %c32_i32_36 = arith.constant 32 : i32
    %64 = vector.broadcast %c32_i32_36 : i32 to vector<40x128xi32>
    %65 = arith.cmpi slt, %58, %64 : vector<40x128xi32>
    %66 = arith.andi %63, %65 : vector<40x128xi1>
    %c0_i32_37 = arith.constant 0 : i32
    %67 = vector.broadcast %c0_i32_37 : i32 to vector<40x128xi32>
    %68 = arith.cmpi sge, %61, %67 : vector<40x128xi32>
    %69 = arith.andi %66, %68 : vector<40x128xi1>
    %c24_i32_38 = arith.constant 24 : i32
    %70 = vector.broadcast %c24_i32_38 : i32 to vector<40x128xi32>
    %71 = arith.cmpi slt, %61, %70 : vector<40x128xi32>
    %72 = arith.andi %69, %71 : vector<40x128xi1>
    %cst_39 = arith.constant -1.000000e+00 : f32
    %73 = vector.broadcast %cst_39 : f32 to vector<40x128xf32>
    %74 = arith.select %72, %57, %73 : vector<40x128xi1>, vector<40x128xf32>
    %75 = vector.extract_strided_slice %74 {offsets = [0, 0], sizes = [40, 24], strides = [1, 1]} : vector<40x128xf32> to vector<40x24xf32>
    %c2_40 = arith.constant 2 : index
    %c0_41 = arith.constant 0 : index
    %c0_42 = arith.constant 0 : index
    %76 = vector.load %arg4[%c2_40, %c0_41, %c0_42] : memref<4x40x24xf32, #tpu.memory_space<vmem>>, vector<1x40x24xf32>
    %77 = vector.shape_cast %76 : vector<1x40x24xf32> to vector<40x24xf32>
    %78 = vector.shape_cast %75 : vector<40x24xf32> to vector<1x40x24xf32>
    tpu.vector_store %arg4[%c2_40, %c0_41, %c0_42], %78 {strides = array<i32>} : memref<4x40x24xf32, #tpu.memory_space<vmem>>, vector<1x40x24xf32>,
    %c3 = arith.constant 3 : index
    %c0_43 = arith.constant 0 : index
    %c0_44 = arith.constant 0 : index
    %79 = vector.load %arg1[%c3, %c0_43, %c0_44] : memref<4x16x16xf32, #tpu.memory_space<vmem>>, vector<1x16x16xf32>
    %80 = vector.shape_cast %79 : vector<1x16x16xf32> to vector<16x16xf32>
    %cst_45 = arith.constant dense<0.000000e+00> : vector<40x16xf32>
    %81 = tpu.matmul %0, %80, %cst_45 {dimension_numbers = #tpu.dot_dimension_numbers<[1], [0], [0], [1], [0, 0, 1, 1], [], []>} : vector<40x16xf32>, vector<16x16xf32>, vector<40x16xf32> -> vector<40x16xf32>
    %c0_46 = arith.constant 0 : index
    %c0_47 = arith.constant 0 : index
    %82 = vector.load %arg3[%c0_46, %c0_47] : memref<16x128xf32, #tpu.memory_space<vmem>>, vector<16x128xf32>
    %cst_48 = arith.constant dense<0.000000e+00> : vector<40x128xf32>
    %83 = tpu.matmul %81, %82, %cst_48 {dimension_numbers = #tpu.dot_dimension_numbers<[1], [0], [0], [1], [0, 0, 1, 1], [], []>} : vector<40x16xf32>, vector<16x128xf32>, vector<40x128xf32> -> vector<40x128xf32>
    %84 = tpu.iota {dimensions = array<i32: 0>} : vector<40x128xi32>
    %85 = tpu.iota {dimensions = array<i32: 1>} : vector<40x128xi32>
    %c0_i32_49 = arith.constant 0 : i32
    %86 = vector.broadcast %c0_i32_49 : i32 to vector<40x128xi32>
    %87 = arith.addi %85, %86 : vector<40x128xi32>
    %c0_i32_50 = arith.constant 0 : i32
    %88 = vector.broadcast %c0_i32_50 : i32 to vector<40x128xi32>
    %89 = arith.cmpi sge, %84, %88 : vector<40x128xi32>
    %c32_i32_51 = arith.constant 32 : i32
    %90 = vector.broadcast %c32_i32_51 : i32 to vector<40x128xi32>
    %91 = arith.cmpi slt, %84, %90 : vector<40x128xi32>
    %92 = arith.andi %89, %91 : vector<40x128xi1>
    %c0_i32_52 = arith.constant 0 : i32
    %93 = vector.broadcast %c0_i32_52 : i32 to vector<40x128xi32>
    %94 = arith.cmpi sge, %87, %93 : vector<40x128xi32>
    %95 = arith.andi %92, %94 : vector<40x128xi1>
    %c24_i32_53 = arith.constant 24 : i32
    %96 = vector.broadcast %c24_i32_53 : i32 to vector<40x128xi32>
    %97 = arith.cmpi slt, %87, %96 : vector<40x128xi32>
    %98 = arith.andi %95, %97 : vector<40x128xi1>
    %cst_54 = arith.constant -1.000000e+00 : f32
    %99 = vector.broadcast %cst_54 : f32 to vector<40x128xf32>
    %100 = arith.select %98, %83, %99 : vector<40x128xi1>, vector<40x128xf32>
    %101 = vector.extract_strided_slice %100 {offsets = [0, 0], sizes = [40, 24], strides = [1, 1]} : vector<40x128xf32> to vector<40x24xf32>
    %c3_55 = arith.constant 3 : index
    %c0_56 = arith.constant 0 : index
    %c0_57 = arith.constant 0 : index
    %102 = vector.load %arg4[%c3_55, %c0_56, %c0_57] : memref<4x40x24xf32, #tpu.memory_space<vmem>>, vector<1x40x24xf32>
    %103 = vector.shape_cast %102 : vector<1x40x24xf32> to vector<40x24xf32>
    %104 = vector.shape_cast %101 : vector<40x24xf32> to vector<1x40x24xf32>
    tpu.vector_store %arg4[%c3_55, %c0_56, %c0_57], %104 {strides = array<i32>} : memref<4x40x24xf32, #tpu.memory_space<vmem>>, vector<1x40x24xf32>,
    return
  }
  func.func @transform_0(%arg0: i32) -> (i32, i32, i32) {
    %c0_i32 = arith.constant 0 : i32
    %c0_i32_0 = arith.constant 0 : i32
    %c0_i32_1 = arith.constant 0 : i32
    return %arg0, %c0_i32, %c0_i32_0 : i32, i32, i32
  }
  func.func @transform_1(%arg0: i32) -> (i32, i32) {
    %c0_i32 = arith.constant 0 : i32
    %c0_i32_0 = arith.constant 0 : i32
    %c0_i32_1 = arith.constant 0 : i32
    return %c0_i32, %c0_i32_0 : i32, i32
  }
  func.func @transform_2(%arg0: i32) -> (i32, i32) {
    %c0_i32 = arith.constant 0 : i32
    %c0_i32_0 = arith.constant 0 : i32
    %c0_i32_1 = arith.constant 0 : i32
    return %c0_i32, %c0_i32_0 : i32, i32
  }
  func.func @transform_3(%arg0: i32) -> (i32, i32, i32) {
    %c0_i32 = arith.constant 0 : i32
    %c0_i32_0 = arith.constant 0 : i32
    %c0_i32_1 = arith.constant 0 : i32
    return %arg0, %c0_i32, %c0_i32_0 : i32, i32, i32
  }
}

module attributes {stable_mosaic.version = 11 : i64} {
  func.func @_rpc_kernel(%arg0: i32, %arg1: memref<4x16x16xf32, #tpu.memory_space<vmem>>, %arg2: memref<40x16xf32, #tpu.memory_space<vmem>>, %arg3: memref<16x128xf32, #tpu.memory_space<vmem>>, %arg4: memref<4x40x24xf32, #tpu.memory_space<vmem>>) attributes {dimension_semantics = [#tpu.dimension_semantics<parallel>], iteration_bounds = array<i64: 2>, scalar_prefetch = 0 : i64, scratch_operands = 0 : i64, tpu.core_type = #tpu.core_type<tc>, window_params = [{transform_indices = @transform_0, window_bounds = array<i64: 4, 16, 16>}, {pipeline_mode = #tpu.pipeline_mode<synchronous>, transform_indices = @transform_1, window_bounds = array<i64: 40, 16>}, {pipeline_mode = #tpu.pipeline_mode<synchronous>, transform_indices = @transform_2, window_bounds = array<i64: 16, 128>}, {transform_indices = @transform_3, window_bounds = array<i64: 4, 40, 24>}]} {
    %c0 = arith.constant 0 : index
    %c0_0 = arith.constant 0 : index
    %0 = vector.load %arg2[%c0, %c0_0] : memref<40x16xf32, #tpu.memory_space<vmem>>, vector<40x16xf32>
    %c0_1 = arith.constant 0 : index
    %c0_2 = arith.constant 0 : index
    %c0_3 = arith.constant 0 : index
    %1 = vector.load %arg1[%c0_1, %c0_2, %c0_3] : memref<4x16x16xf32, #tpu.memory_space<vmem>>, vector<1x16x16xf32>
    %2 = vector.shape_cast %1 : vector<1x16x16xf32> to vector<16x16xf32>
    %cst = arith.constant dense<0.000000e+00> : vector<40x16xf32>
    %3 = tpu.matmul %0, %2, %cst {dimension_numbers = #tpu.dot_dimension_numbers<[1], [0], [0], [1], [0, 0, 1, 1], [], []>} : vector<40x16xf32>, vector<16x16xf32>, vector<40x16xf32> -> vector<40x16xf32>
    %c0_4 = arith.constant 0 : index
    %c0_5 = arith.constant 0 : index
    %4 = vector.load %arg3[%c0_4, %c0_5] : memref<16x128xf32, #tpu.memory_space<vmem>>, vector<16x128xf32>
    %cst_6 = arith.constant dense<0.000000e+00> : vector<40x128xf32>
    %5 = tpu.matmul %3, %4, %cst_6 {dimension_numbers = #tpu.dot_dimension_numbers<[1], [0], [0], [1], [0, 0, 1, 1], [], []>} : vector<40x16xf32>, vector<16x128xf32>, vector<40x128xf32> -> vector<40x128xf32>
    %6 = tpu.iota {dimensions = array<i32: 0>} : vector<40x128xi32>
    %7 = tpu.iota {dimensions = array<i32: 1>} : vector<40x128xi32>
    %c0_i32 = arith.constant 0 : i32
    %8 = vector.broadcast %c0_i32 : i32 to vector<40x128xi32>
    %9 = arith.addi %7, %8 : vector<40x128xi32>
    %c0_i32_7 = arith.constant 0 : i32
    %10 = vector.broadcast %c0_i32_7 : i32 to vector<40x128xi32>
    %11 = arith.cmpi sge, %6, %10 : vector<40x128xi32>
    %c32_i32 = arith.constant 32 : i32
    %12 = vector.broadcast %c32_i32 : i32 to vector<40x128xi32>
    %13 = arith.cmpi slt, %6, %12 : vector<40x128xi32>
    %14 = arith.andi %11, %13 : vector<40x128xi1>
    %c0_i32_8 = arith.constant 0 : i32
    %15 = vector.broadcast %c0_i32_8 : i32 to vector<40x128xi32>
    %16 = arith.cmpi sge, %9, %15 : vector<40x128xi32>
    %17 = arith.andi %14, %16 : vector<40x128xi1>
    %c24_i32 = arith.constant 24 : i32
    %18 = vector.broadcast %c24_i32 : i32 to vector<40x128xi32>
    %19 = arith.cmpi slt, %9, %18 : vector<40x128xi32>
    %20 = arith.andi %17, %19 : vector<40x128xi1>
    %cst_9 = arith.constant -1.000000e+00 : f32
    %21 = vector.broadcast %cst_9 : f32 to vector<40x128xf32>
    %22 = arith.select %20, %5, %21 : vector<40x128xi1>, vector<40x128xf32>
    %23 = vector.extract_strided_slice %22 {offsets = [0, 0], sizes = [40, 24], strides = [1, 1]} : vector<40x128xf32> to vector<40x24xf32>
    %c0_10 = arith.constant 0 : index
    %c0_11 = arith.constant 0 : index
    %c0_12 = arith.constant 0 : index
    %24 = vector.load %arg4[%c0_10, %c0_11, %c0_12] : memref<4x40x24xf32, #tpu.memory_space<vmem>>, vector<1x40x24xf32>
    %25 = vector.shape_cast %24 : vector<1x40x24xf32> to vector<40x24xf32>
    %26 = vector.shape_cast %23 : vector<40x24xf32> to vector<1x40x24xf32>
    tpu.vector_store %arg4[%c0_10, %c0_11, %c0_12], %26 {strides = array<i32>} : memref<4x40x24xf32, #tpu.memory_space<vmem>>, vector<1x40x24xf32>,
    %c1 = arith.constant 1 : index
    %c0_13 = arith.constant 0 : index
    %c0_14 = arith.constant 0 : index
    %27 = vector.load %arg1[%c1, %c0_13, %c0_14] : memref<4x16x16xf32, #tpu.memory_space<vmem>>, vector<1x16x16xf32>
    %28 = vector.shape_cast %27 : vector<1x16x16xf32> to vector<16x16xf32>
    %cst_15 = arith.constant dense<0.000000e+00> : vector<40x16xf32>
    %29 = tpu.matmul %0, %28, %cst_15 {dimension_numbers = #tpu.dot_dimension_numbers<[1], [0], [0], [1], [0, 0, 1, 1], [], []>} : vector<40x16xf32>, vector<16x16xf32>, vector<40x16xf32> -> vector<40x16xf32>
    %c0_16 = arith.constant 0 : index
    %c0_17 = arith.constant 0 : index
    %30 = vector.load %arg3[%c0_16, %c0_17] : memref<16x128xf32, #tpu.memory_space<vmem>>, vector<16x128xf32>
    %cst_18 = arith.constant dense<0.000000e+00> : vector<40x128xf32>
    %31 = tpu.matmul %29, %30, %cst_18 {dimension_numbers = #tpu.dot_dimension_numbers<[1], [0], [0], [1], [0, 0, 1, 1], [], []>} : vector<40x16xf32>, vector<16x128xf32>, vector<40x128xf32> -> vector<40x128xf32>
    %32 = tpu.iota {dimensions = array<i32: 0>} : vector<40x128xi32>
    %33 = tpu.iota {dimensions = array<i32: 1>} : vector<40x128xi32>
    %c0_i32_19 = arith.constant 0 : i32
    %34 = vector.broadcast %c0_i32_19 : i32 to vector<40x128xi32>
    %35 = arith.addi %33, %34 : vector<40x128xi32>
    %c0_i32_20 = arith.constant 0 : i32
    %36 = vector.broadcast %c0_i32_20 : i32 to vector<40x128xi32>
    %37 = arith.cmpi sge, %32, %36 : vector<40x128xi32>
    %c32_i32_21 = arith.constant 32 : i32
    %38 = vector.broadcast %c32_i32_21 : i32 to vector<40x128xi32>
    %39 = arith.cmpi slt, %32, %38 : vector<40x128xi32>
    %40 = arith.andi %37, %39 : vector<40x128xi1>
    %c0_i32_22 = arith.constant 0 : i32
    %41 = vector.broadcast %c0_i32_22 : i32 to vector<40x128xi32>
    %42 = arith.cmpi sge, %35, %41 : vector<40x128xi32>
    %43 = arith.andi %40, %42 : vector<40x128xi1>
    %c24_i32_23 = arith.constant 24 : i32
    %44 = vector.broadcast %c24_i32_23 : i32 to vector<40x128xi32>
    %45 = arith.cmpi slt, %35, %44 : vector<40x128xi32>
    %46 = arith.andi %43, %45 : vector<40x128xi1>
    %cst_24 = arith.constant -1.000000e+00 : f32
    %47 = vector.broadcast %cst_24 : f32 to vector<40x128xf32>
    %48 = arith.select %46, %31, %47 : vector<40x128xi1>, vector<40x128xf32>
    %49 = vector.extract_strided_slice %48 {offsets = [0, 0], sizes = [40, 24], strides = [1, 1]} : vector<40x128xf32> to vector<40x24xf32>
    %c1_25 = arith.constant 1 : index
    %c0_26 = arith.constant 0 : index
    %c0_27 = arith.constant 0 : index
    %50 = vector.load %arg4[%c1_25, %c0_26, %c0_27] : memref<4x40x24xf32, #tpu.memory_space<vmem>>, vector<1x40x24xf32>
    %51 = vector.shape_cast %50 : vector<1x40x24xf32> to vector<40x24xf32>
    %52 = vector.shape_cast %49 : vector<40x24xf32> to vector<1x40x24xf32>
    tpu.vector_store %arg4[%c1_25, %c0_26, %c0_27], %52 {strides = array<i32>} : memref<4x40x24xf32, #tpu.memory_space<vmem>>, vector<1x40x24xf32>,
    %c2 = arith.constant 2 : index
    %c0_28 = arith.constant 0 : index
    %c0_29 = arith.constant 0 : index
    %53 = vector.load %arg1[%c2, %c0_28, %c0_29] : memref<4x16x16xf32, #tpu.memory_space<vmem>>, vector<1x16x16xf32>
    %54 = vector.shape_cast %53 : vector<1x16x16xf32> to vector<16x16xf32>
    %cst_30 = arith.constant dense<0.000000e+00> : vector<40x16xf32>
    %55 = tpu.matmul %0, %54, %cst_30 {dimension_numbers = #tpu.dot_dimension_numbers<[1], [0], [0], [1], [0, 0, 1, 1], [], []>} : vector<40x16xf32>, vector<16x16xf32>, vector<40x16xf32> -> vector<40x16xf32>
    %c0_31 = arith.constant 0 : index
    %c0_32 = arith.constant 0 : index
    %56 = vector.load %arg3[%c0_31, %c0_32] : memref<16x128xf32, #tpu.memory_space<vmem>>, vector<16x128xf32>
    %cst_33 = arith.constant dense<0.000000e+00> : vector<40x128xf32>
    %57 = tpu.matmul %55, %56, %cst_33 {dimension_numbers = #tpu.dot_dimension_numbers<[1], [0], [0], [1], [0, 0, 1, 1], [], []>} : vector<40x16xf32>, vector<16x128xf32>, vector<40x128xf32> -> vector<40x128xf32>
    %58 = tpu.iota {dimensions = array<i32: 0>} : vector<40x128xi32>
    %59 = tpu.iota {dimensions = array<i32: 1>} : vector<40x128xi32>
    %c0_i32_34 = arith.constant 0 : i32
    %60 = vector.broadcast %c0_i32_34 : i32 to vector<40x128xi32>
    %61 = arith.addi %59, %60 : vector<40x128xi32>
    %c0_i32_35 = arith.constant 0 : i32
    %62 = vector.broadcast %c0_i32_35 : i32 to vector<40x128xi32>
    %63 = arith.cmpi sge, %58, %62 : vector<40x128xi32>
    %c32_i32_36 = arith.constant 32 : i32
    %64 = vector.broadcast %c32_i32_36 : i32 to vector<40x128xi32>
    %65 = arith.cmpi slt, %58, %64 : vector<40x128xi32>
    %66 = arith.andi %63, %65 : vector<40x128xi1>
    %c0_i32_37 = arith.constant 0 : i32
    %67 = vector.broadcast %c0_i32_37 : i32 to vector<40x128xi32>
    %68 = arith.cmpi sge, %61, %67 : vector<40x128xi32>
    %69 = arith.andi %66, %68 : vector<40x128xi1>
    %c24_i32_38 = arith.constant 24 : i32
    %70 = vector.broadcast %c24_i32_38 : i32 to vector<40x128xi32>
    %71 = arith.cmpi slt, %61, %70 : vector<40x128xi32>
    %72 = arith.andi %69, %71 : vector<40x128xi1>
    %cst_39 = arith.constant -1.000000e+00 : f32
    %73 = vector.broadcast %cst_39 : f32 to vector<40x128xf32>
    %74 = arith.select %72, %57, %73 : vector<40x128xi1>, vector<40x128xf32>
    %75 = vector.extract_strided_slice %74 {offsets = [0, 0], sizes = [40, 24], strides = [1, 1]} : vector<40x128xf32> to vector<40x24xf32>
    %c2_40 = arith.constant 2 : index
    %c0_41 = arith.constant 0 : index
    %c0_42 = arith.constant 0 : index
    %76 = vector.load %arg4[%c2_40, %c0_41, %c0_42] : memref<4x40x24xf32, #tpu.memory_space<vmem>>, vector<1x40x24xf32>
    %77 = vector.shape_cast %76 : vector<1x40x24xf32> to vector<40x24xf32>
    %78 = vector.shape_cast %75 : vector<40x24xf32> to vector<1x40x24xf32>
    tpu.vector_store %arg4[%c2_40, %c0_41, %c0_42], %78 {strides = array<i32>} : memref<4x40x24xf32, #tpu.memory_space<vmem>>, vector<1x40x24xf32>,
    %c3 = arith.constant 3 : index
    %c0_43 = arith.constant 0 : index
    %c0_44 = arith.constant 0 : index
    %79 = vector.load %arg1[%c3, %c0_43, %c0_44] : memref<4x16x16xf32, #tpu.memory_space<vmem>>, vector<1x16x16xf32>
    %80 = vector.shape_cast %79 : vector<1x16x16xf32> to vector<16x16xf32>
    %cst_45 = arith.constant dense<0.000000e+00> : vector<40x16xf32>
    %81 = tpu.matmul %0, %80, %cst_45 {dimension_numbers = #tpu.dot_dimension_numbers<[1], [0], [0], [1], [0, 0, 1, 1], [], []>} : vector<40x16xf32>, vector<16x16xf32>, vector<40x16xf32> -> vector<40x16xf32>
    %c0_46 = arith.constant 0 : index
    %c0_47 = arith.constant 0 : index
    %82 = vector.load %arg3[%c0_46, %c0_47] : memref<16x128xf32, #tpu.memory_space<vmem>>, vector<16x128xf32>
    %cst_48 = arith.constant dense<0.000000e+00> : vector<40x128xf32>
    %83 = tpu.matmul %81, %82, %cst_48 {dimension_numbers = #tpu.dot_dimension_numbers<[1], [0], [0], [1], [0, 0, 1, 1], [], []>} : vector<40x16xf32>, vector<16x128xf32>, vector<40x128xf32> -> vector<40x128xf32>
    %84 = tpu.iota {dimensions = array<i32: 0>} : vector<40x128xi32>
    %85 = tpu.iota {dimensions = array<i32: 1>} : vector<40x128xi32>
    %c0_i32_49 = arith.constant 0 : i32
    %86 = vector.broadcast %c0_i32_49 : i32 to vector<40x128xi32>
    %87 = arith.addi %85, %86 : vector<40x128xi32>
    %c0_i32_50 = arith.constant 0 : i32
    %88 = vector.broadcast %c0_i32_50 : i32 to vector<40x128xi32>
    %89 = arith.cmpi sge, %84, %88 : vector<40x128xi32>
    %c32_i32_51 = arith.constant 32 : i32
    %90 = vector.broadcast %c32_i32_51 : i32 to vector<40x128xi32>
    %91 = arith.cmpi slt, %84, %90 : vector<40x128xi32>
    %92 = arith.andi %89, %91 : vector<40x128xi1>
    %c0_i32_52 = arith.constant 0 : i32
    %93 = vector.broadcast %c0_i32_52 : i32 to vector<40x128xi32>
    %94 = arith.cmpi sge, %87, %93 : vector<40x128xi32>
    %95 = arith.andi %92, %94 : vector<40x128xi1>
    %c24_i32_53 = arith.constant 24 : i32
    %96 = vector.broadcast %c24_i32_53 : i32 to vector<40x128xi32>
    %97 = arith.cmpi slt, %87, %96 : vector<40x128xi32>
    %98 = arith.andi %95, %97 : vector<40x128xi1>
    %cst_54 = arith.constant -1.000000e+00 : f32
    %99 = vector.broadcast %cst_54 : f32 to vector<40x128xf32>
    %100 = arith.select %98, %83, %99 : vector<40x128xi1>, vector<40x128xf32>
    %101 = vector.extract_strided_slice %100 {offsets = [0, 0], sizes = [40, 24], strides = [1, 1]} : vector<40x128xf32> to vector<40x24xf32>
    %c3_55 = arith.constant 3 : index
    %c0_56 = arith.constant 0 : index
    %c0_57 = arith.constant 0 : index
    %102 = vector.load %arg4[%c3_55, %c0_56, %c0_57] : memref<4x40x24xf32, #tpu.memory_space<vmem>>, vector<1x40x24xf32>
    %103 = vector.shape_cast %102 : vector<1x40x24xf32> to vector<40x24xf32>
    %104 = vector.shape_cast %101 : vector<40x24xf32> to vector<1x40x24xf32>
    tpu.vector_store %arg4[%c3_55, %c0_56, %c0_57], %104 {strides = array<i32>} : memref<4x40x24xf32, #tpu.memory_space<vmem>>, vector<1x40x24xf32>,
    return
  }
  func.func @transform_0(%arg0: i32) -> (i32, i32, i32) {
    %c0_i32 = arith.constant 0 : i32
    %c0_i32_0 = arith.constant 0 : i32
    %c0_i32_1 = arith.constant 0 : i32
    return %arg0, %c0_i32, %c0_i32_0 : i32, i32, i32
  }
  func.func @transform_1(%arg0: i32) -> (i32, i32) {
    %c0_i32 = arith.constant 0 : i32
    %c0_i32_0 = arith.constant 0 : i32
    %c0_i32_1 = arith.constant 0 : i32
    return %c0_i32, %c0_i32_0 : i32, i32
  }
  func.func @transform_2(%arg0: i32) -> (i32, i32) {
    %c0_i32 = arith.constant 0 : i32
    %c0_i32_0 = arith.constant 0 : i32
    %c0_i32_1 = arith.constant 0 : i32
    return %c0_i32, %c0_i32_0 : i32, i32
  }
  func.func @transform_3(%arg0: i32) -> (i32, i32, i32) {
    %c0_i32 = arith.constant 0 : i32
    %c0_i32_0 = arith.constant 0 : i32
    %c0_i32_1 = arith.constant 0 : i32
    return %arg0, %c0_i32, %c0_i32_0 : i32, i32, i32
  }
}

</mosaic_0001>

<llo_original>
// kernel: tpu_custom_call.1
$region0: #{tpu_custom_call.1}
  #allocation0 [shape = 'u32[]', space=smem, size = 0x4, offset = 0x4, fixed_abs, tag = 'smem constant byte address 0x4 - core index']
  #allocation1 [shape = 'u32[144,128]{1,0:T(1,128)}', space=vmem, size = 0x12000, scoped, tag = 'internal scratch']
  %s0 = inlined_call_operand.hbm [shape: f32[8,16,16], index: 0, kind: input, shape index: {}]
  %s1 = inlined_call_operand.vmem [shape: f32[40,16], index: 1, kind: input, shape index: {}]
  %s2 = inlined_call_operand.vmem [shape: f32[16,128], index: 2, kind: input, shape index: {}]
  %s3 = inlined_call_operand.vmem [shape: f32[8,40,24], index: 3, kind: output, shape index: {}]
  %s4 = sld [smem:[#allocation0]]
  $region49: #{tpu_custom_call.1} parent=0
    _
  %s6 = ssub.s32 1, %s4
  %s7 = scalar_select 0, %s6, %s4
  $region1: #{tpu_custom_call.1} parent=0
    #allocation2 [shape = 'u8[65536]{0}', space=vmem, size = 0x10000, scoped, tag = 'input window, operand 0']
    #allocation3 [shape = 's32[2]{0}', space=sflag, size = 0x8, scoped, tag = 'scoped memory for tpu_custom_call.1']
    %8 = vsyncpa [#allocation3], 0
    %s9 = scalar_lea.sflag [#allocation3], 1
    %10 = vsyncpa %s9, 0
    loop: start=0, step=1, limit=4
    $region2: #{tpu_custom_call.1} parent=1 // loop_pre_header
      _
    $region3: #{tpu_custom_call.1} parent=1 // loop_header
      %s12 = sphi 0, %s16
      %p13 = scmp.ge.s32.totalorder %s12, 4
      %s22 = sphi 0, %s24
      %s25 = sphi 0, %s22
      %s26 = sphi 0, %s25
      %s42 = sphi 0, %s26
      %s46 = sphi 0, %s46
      %s48 = sphi 0, %s46
      %s49 = sphi 0, %s48
      %s63 = sphi 0, %s49
      %s67 = sphi 0, %s67
      %s69 = sphi 0, %s67
      %s70 = sphi 0, %s69
      %s84 = sphi 0, %s70
      %s90 = sphi 0, %s92
      %s93 = sphi 0, %s90
      %s94 = sphi 0, %s93
      %s110 = sphi 0, %s94
    $region4: #{tpu_custom_call.1} parent=1 // loop_header_branch
      %15 = sbr.rel (%p13) target = $region8
    $region5: #{tpu_custom_call.1} parent=1 // loop_body
      %s17 = ssub.s32 %s12, 1
      %s18 = ssub.s32 %s12, 2
      %s19 = sadd.s32 %s12, 1
      %s20 = ssub.s32 %s12, %s19
      %p21 = scmp.eq.s32.totalorder %s20, 0
      %s23 = sadd.s32 %s22, 1
      %s24 = scalar_select %p21, %s22, %s23
      %p27 = pneg %p21
      %p28 = scmp.eq.s32.totalorder %s12, 1
      %p29 = por %p27, %p28
      %p30 = scmp.ne.s32.totalorder %s22, %s25
      %p31 = scmp.eq.s32.totalorder %s12, 0
      %p32 = por %p30, %p31
      %p33 = scmp.ne.s32.totalorder %s22, %s25
      %p34 = scmp.eq.s32.totalorder %s17, 1
      %p35 = por %p33, %p34
      %p36 = scmp.ne.s32.totalorder %s25, %s26
      %p37 = scmp.eq.s32.totalorder %s17, 0
      %p38 = por %p36, %p37
      %p39 = scmp.ne.s32.totalorder %s25, %s26
      %p40 = scmp.eq.s32.totalorder %s18, 1
      %p41 = por %p39, %p40
      %p43 = scmp.ne.s32.totalorder %s26, %s42
      %p44 = scmp.eq.s32.totalorder %s18, 0
      %p45 = por %p43, %p44
      %s47 = sadd.s32 %s46, 1
      %p50 = scmp.eq.s32.totalorder %s12, 1
      %p51 = scmp.ne.s32.totalorder %s46, %s48
      %p52 = scmp.eq.s32.totalorder %s12, 0
      %p53 = por %p51, %p52
      %p54 = scmp.ne.s32.totalorder %s46, %s48
      %p55 = scmp.eq.s32.totalorder %s17, 1
      %p56 = por %p54, %p55
      %p57 = scmp.ne.s32.totalorder %s48, %s49
      %p58 = scmp.eq.s32.totalorder %s17, 0
      %p59 = por %p57, %p58
      %p60 = scmp.ne.s32.totalorder %s48, %s49
      %p61 = scmp.eq.s32.totalorder %s18, 1
      %p62 = por %p60, %p61
      %p64 = scmp.ne.s32.totalorder %s49, %s63
      %p65 = scmp.eq.s32.totalorder %s18, 0
      %p66 = por %p64, %p65
      %s68 = sadd.s32 %s67, 1
      %p71 = scmp.eq.s32.totalorder %s12, 1
      %p72 = scmp.ne.s32.totalorder %s67, %s69
      %p73 = scmp.eq.s32.totalorder %s12, 0
      %p74 = por %p72, %p73
      %p75 = scmp.ne.s32.totalorder %s67, %s69
      %p76 = scmp.eq.s32.totalorder %s17, 1
      %p77 = por %p75, %p76
      %p78 = scmp.ne.s32.totalorder %s69, %s70
      %p79 = scmp.eq.s32.totalorder %s17, 0
      %p80 = por %p78, %p79
      %p81 = scmp.ne.s32.totalorder %s69, %s70
      %p82 = scmp.eq.s32.totalorder %s18, 1
      %p83 = por %p81, %p82
      %p85 = scmp.ne.s32.totalorder %s70, %s84
      %p86 = scmp.eq.s32.totalorder %s18, 0
      %p87 = por %p85, %p86
      %s88 = ssub.s32 %s12, %s19
      %p89 = scmp.eq.s32.totalorder %s88, 0
      %s91 = sadd.s32 %s90, 1
      %s92 = scalar_select %p89, %s90, %s91
      %p95 = pneg %p89
      %p96 = scmp.eq.s32.totalorder %s12, 1
      %p97 = por %p95, %p96
      %p98 = scmp.ne.s32.totalorder %s90, %s93
      %p99 = scmp.eq.s32.totalorder %s12, 0
      %p100 = por %p98, %p99
      %p101 = scmp.ne.s32.totalorder %s90, %s93
      %p102 = scmp.eq.s32.totalorder %s17, 1
      %p103 = por %p101, %p102
      %p104 = scmp.ne.s32.totalorder %s93, %s94
      %p105 = scmp.eq.s32.totalorder %s17, 0
      %p106 = por %p104, %p105
      %p107 = scmp.ne.s32.totalorder %s93, %s94
      %p108 = scmp.eq.s32.totalorder %s18, 1
      %p109 = por %p107, %p108
      %p111 = scmp.ne.s32.totalorder %s94, %s110
      %p112 = scmp.eq.s32.totalorder %s18, 0
      %p113 = por %p111, %p112
      %p114 = scmp.le.s32.totalorder 1, %s12
      %p115 = scmp.lt.s32.totalorder %s12, 3
      %p116 = pnand %p114, %p115
      %p117 = pneg %p116
      // Predicated region
      $region9: #{tpu_custom_call.1} parent=5 // pred_check
        _
      $region10: #{tpu_custom_call.1} parent=5 // pred_check_branch
        %119 = sbr.rel (%p116) target = $region12
      $region11: #{tpu_custom_call.1} parent=5 // pred_region
        %s120 = ssub.s32 %s12, 1
        // Predicated region
        $region13: #{tpu_custom_call.1} parent=11 // pred_check
          %p121 = pneg %p59
        $region14: #{tpu_custom_call.1} parent=11 // pred_check_branch
          %123 = sbr.rel (%p121) target = $region16
        $region15: #{tpu_custom_call.1} parent=11 // pred_region
          _
        $region16: #{tpu_custom_call.1} parent=11 // pred_fallthru
          _
        // Predicated region
        $region17: #{tpu_custom_call.1} parent=11 // pred_check
          %p124 = pneg %p80
        $region18: #{tpu_custom_call.1} parent=11 // pred_check_branch
          %126 = sbr.rel (%p124) target = $region20
        $region19: #{tpu_custom_call.1} parent=11 // pred_region
          _
        $region20: #{tpu_custom_call.1} parent=11 // pred_fallthru
          _
      $region12: #{tpu_custom_call.1} parent=5 // pred_fallthru
        _
      %p127 = scmp.lt.s32.totalorder %s12, 2
      // Predicated region
      $region21: #{tpu_custom_call.1} parent=5 // pred_check
        %p128 = pneg %p127
      $region22: #{tpu_custom_call.1} parent=5 // pred_check_branch
        %130 = sbr.rel (%p128) target = $region24
      $region23: #{tpu_custom_call.1} parent=5 // pred_region
        // Predicated region
        $region25: #{tpu_custom_call.1} parent=23 // pred_check
          %p131 = pneg %p32
        $region26: #{tpu_custom_call.1} parent=23 // pred_check_branch
          %133 = sbr.rel (%p131) target = $region28
        $region27: #{tpu_custom_call.1} parent=23 // pred_region
          %s134 = sand.u32 %s22, 1
          %s135 = scalar_lea.sflag [#allocation3], %s134
          %s136 = sand.u32 %s22, 1
          %s137 = smul.addr %s136, 64
          %s138 = scalar_lea.vmem [#allocation2], %s137
          %s139 = smul.u32 4, %s12
          %s141 = ssub.s32 1024, 1024
          %142 = vsyncadd %s135, %s141
          %s143 = smul.addr %s139, 2
          %s144 = smul.addr %s143, 128
          %s145 = scalar_lea.hbm %s0, %s144
          %s146 = sshll.u32 %s138, 4
          %s147 = int_to_ptr.vmem [resolvable:$true] %s146
          %152 = dma.hbm_to_vmem [thread:$0]  %s145, 1024, %s147, %s135, 128, 128, 8
        $region28: #{tpu_custom_call.1} parent=23 // pred_fallthru
          _
      $region24: #{tpu_custom_call.1} parent=5 // pred_fallthru
        _
      %p153 = scmp.le.s32.totalorder 1, %s12
      %p154 = scmp.lt.s32.totalorder %s12, 3
      %p155 = pnand %p153, %p154
      %p156 = pneg %p155
      // Predicated region
      $region29: #{tpu_custom_call.1} parent=5 // pred_check
        _
      $region30: #{tpu_custom_call.1} parent=5 // pred_check_branch
        %158 = sbr.rel (%p155) target = $region32
      $region31: #{tpu_custom_call.1} parent=5 // pred_region
        %s159 = ssub.s32 %s12, 1
        %s160 = sand.u32 %s25, 1
        %s161 = scalar_lea.sflag [#allocation3], %s160
        %s162 = sand.u32 %s25, 1
        %s163 = smul.addr %s162, 64
        %s164 = scalar_lea.vmem [#allocation2], %s163
        // Predicated region
        $region33: #{tpu_custom_call.1} parent=31 // pred_check
          %p165 = pneg %p38
        $region34: #{tpu_custom_call.1} parent=31 // pred_check_branch
          %167 = sbr.rel (%p165) target = $region36
        $region35: #{tpu_custom_call.1} parent=31 // pred_region
          %168 = dma.done %s161, 1024
        $region36: #{tpu_custom_call.1} parent=31 // pred_fallthru
          _
        %s169 = sand.u32 %s25, 1
        %s170 = scalar_lea.sflag [#allocation3], %s169
        %s171 = sand.u32 %s25, 1
        %s172 = smul.addr %s171, 64
        %s173 = scalar_lea.vmem [#allocation2], %s172
        %p174 = pneg %p38
        %p175 = pneg %p35
        %p176 = pneg %p59
        %p177 = pneg %p56
        %p178 = pneg %p80
        %p179 = pneg %p77
        %p180 = pneg %p106
        %p181 = pneg %p103
        %s182 = smul.u32 4, %s17
        %p183 = scmp.lt.s32.totalorder %s182, 7
        %s184 = scalar_select %p183, %s182, 7
        %s185 = smul.addr %s184, 5
        %s186 = smul.addr %s185, 8
        %s187 = scalar_lea.vmem %s3, %s186
        %s188 = smul.u32 4, %s17
        %s189 = smul.u32 4, %s17
        %p190 = scmp.lt.s32.totalorder %s189, 7
        %s191 = scalar_select %p190, %s189, 7
        %s192 = smul.addr %s191, 5
        %s193 = smul.addr %s192, 8
        %s194 = scalar_lea.vmem %s3, %s193
        %s195 = smul.u32 4, %s17
        %v196 = vld [vmem:[%s1] sm:$0xff]
        %v197 = vld [vmem:[%s1 + $0x8] sm:$0xff]
        %v198 = vld [vmem:[%s1 + $0x10] sm:$0xff]
        %v199 = vld [vmem:[%s1 + $0x18] sm:$0xff]
        %v200 = vld [vmem:[%s1 + $0x20] sm:$0xff]
        %v201 = vld [vmem:[%s164] sm:$0xff]
        %v202 = vld [vmem:[%s164 + $0x8] sm:$0xff]
        %vm203 = vcmask 130048
        %v205 = vsel %vm203, %v196, 0
        %v208 = vsel %vm203, %v197, 0
        %v211 = vsel %vm203, %v198, 0
        %v214 = vsel %vm203, %v199, 0
        %v217 = vsel %vm203, %v200, 0
        %219 = vmatprep.subr.mxu0 0.0
        %220 = vmatpush1.msra.mxu0 %v201
        %221 = vmatprep.subr.mxu0 0.0
        %222 = vmatpush1.msra.mxu0 %v202
        %223 = vmatprep.subr.mxu0 0.0
        %224 = vmatpush1.msra.mxu0 0.0
        %225 = vmatprep.subr.mxu0 0.0
        %226 = vmatpush1.msra.mxu0 0.0
        %227 = vmatprep.subr.mxu0 0.0
        %228 = vmatpush1.msra.mxu0 0.0
        %229 = vmatprep.subr.mxu0 0.0
        %230 = vmatpush1.msra.mxu0 0.0
        %231 = vmatprep.subr.mxu0 0.0
        %232 = vmatpush1.msra.mxu0 0.0
        %233 = vmatprep.subr.mxu0 0.0
        %234 = vmatpush1.msra.mxu0 0.0
        %235 = vmatprep.subr.mxu0 0.0
        %236 = vmatpush1.msra.mxu0 0.0
        %237 = vmatprep.subr.mxu0 0.0
        %238 = vmatpush1.msra.mxu0 0.0
        %239 = vmatprep.subr.mxu0 0.0
        %240 = vmatpush1.msra.mxu0 0.0
        %241 = vmatprep.subr.mxu0 0.0
        %242 = vmatpush1.msra.mxu0 0.0
        %243 = vmatprep.subr.mxu0 0.0
        %244 = vmatpush1.msra.mxu0 0.0
        %245 = vmatprep.subr.mxu0 0.0
        %246 = vmatpush1.msra.mxu0 0.0
        %247 = vmatprep.subr.mxu0 0.0
        %248 = vmatpush1.msra.mxu0 0.0
        %249 = vmatprep.subr.mxu0 0.0
        %250 = vmatpush1.msra.mxu0 0.0
        %251 = vmatprep.subr.mxu0 0.0
        %252 = vmatpush1.msra.mxu0 0.0
        %253 = vmatprep.subr.mxu0 0.0
        %254 = vmatpush1.msra.mxu0 0.0
        %255 = vmatprep.subr.mxu0 0.0
        %256 = vmatpush1.msra.mxu0 0.0
        %257 = vmatprep.subr.mxu0 0.0
        %258 = vmatpush1.msra.mxu0 0.0
        %259 = vmatprep.subr.mxu0 0.0
        %260 = vmatpush1.msra.mxu0 0.0
        %261 = vmatprep.subr.mxu0 0.0
        %262 = vmatpush1.msra.mxu0 0.0
        %263 = vmatprep.subr.mxu0 0.0
        %264 = vmatpush1.msra.mxu0 0.0
        %265 = vmatprep.subr.mxu0 0.0
        %266 = vmatpush1.msra.mxu0 0.0
        %267 = vmatprep.subr.mxu0 0.0
        %268 = vmatpush1.msra.mxu0 0.0
        %269 = vmatprep.subr.mxu0 0.0
        %270 = vmatpush1.msra.mxu0 0.0
        %271 = vmatprep.subr.mxu0 0.0
        %272 = vmatpush1.msra.mxu0 0.0
        %273 = vmatprep.subr.mxu0 0.0
        %274 = vmatpush1.msra.mxu0 0.0
        %275 = vmatprep.subr.mxu0 0.0
        %276 = vmatpush1.msra.mxu0 0.0
        %277 = vmatprep.subr.mxu0 0.0
        %278 = vmatpush1.msra.mxu0 0.0
        %279 = vmatprep.subr.mxu0 0.0
        %280 = vmatpush1.msra.mxu0 0.0
        %281 = vmatprep.subr.mxu0 0.0
        %282 = vmatpush1.msra.mxu0 0.0
        %283 = vmatprep.mubr.f32.mxu0 0.0
        %284 = vmatmul.mubr.f32.gmra.mrb[0].mxu0 %v205
        %v285 = vpop.f32.mrb[0].mxu0
        %v286 = vadd.f32 0.0, %v285
        %v287 = vpop.f32.mrb[0].mxu0
        %288 = vmatprep.mubr.f32.mxu0 0.0
        %289 = vmatmul.mubr.f32.gmra.mrb[0].mxu0 %v208
        %v290 = vpop.f32.mrb[0].mxu0
        %v291 = vadd.f32 0.0, %v290
        %v292 = vpop.f32.mrb[0].mxu0
        %293 = vmatprep.mubr.f32.mxu0 0.0
        %294 = vmatmul.mubr.f32.gmra.mrb[0].mxu0 %v211
        %v295 = vpop.f32.mrb[0].mxu0
        %v296 = vadd.f32 0.0, %v295
        %v297 = vpop.f32.mrb[0].mxu0
        %298 = vmatprep.mubr.f32.mxu0 0.0
        %299 = vmatmul.mubr.f32.gmra.mrb[0].mxu0 %v214
        %v300 = vpop.f32.mrb[0].mxu0
        %v301 = vadd.f32 0.0, %v300
        %v302 = vpop.f32.mrb[0].mxu0
        %303 = vmatprep.mubr.f32.mxu0 0.0
        %304 = vmatmul.mubr.f32.gmra.mrb[0].mxu0 %v217
        %v305 = vpop.f32.mrb[0].mxu0
        %v306 = vadd.f32 0.0, %v305
        %v307 = vpop.f32.mrb[0].mxu0
        %308 = vdwg.mxu0
        %v309 = vld [vmem:[%s2] sm:$0xff]
        %v310 = vld [vmem:[%s2 + $0x8] sm:$0xff]
        %v312 = vsel %vm203, %v286, 0
        %v315 = vsel %vm203, %v291, 0
        %v318 = vsel %vm203, %v296, 0
        %v321 = vsel %vm203, %v301, 0
        %v324 = vsel %vm203, %v306, 0
        %326 = vmatprep.subr.mxu0 0.0
        %327 = vmatpush1.msra.mxu0 %v309
        %328 = vmatprep.subr.mxu0 0.0
        %329 = vmatpush1.msra.mxu0 %v310
        %330 = vmatprep.subr.mxu0 0.0
        %331 = vmatpush1.msra.mxu0 0.0
        %332 = vmatprep.subr.mxu0 0.0
        %333 = vmatpush1.msra.mxu0 0.0
        %334 = vmatprep.subr.mxu0 0.0
        %335 = vmatpush1.msra.mxu0 0.0
        %336 = vmatprep.subr.mxu0 0.0
        %337 = vmatpush1.msra.mxu0 0.0
        %338 = vmatprep.subr.mxu0 0.0
        %339 = vmatpush1.msra.mxu0 0.0
        %340 = vmatprep.subr.mxu0 0.0
        %341 = vmatpush1.msra.mxu0 0.0
        %342 = vmatprep.subr.mxu0 0.0
        %343 = vmatpush1.msra.mxu0 0.0
        %344 = vmatprep.subr.mxu0 0.0
        %345 = vmatpush1.msra.mxu0 0.0
        %346 = vmatprep.subr.mxu0 0.0
        %347 = vmatpush1.msra.mxu0 0.0
        %348 = vmatprep.subr.mxu0 0.0
        %349 = vmatpush1.msra.mxu0 0.0
        %350 = vmatprep.subr.mxu0 0.0
        %351 = vmatpush1.msra.mxu0 0.0
        %352 = vmatprep.subr.mxu0 0.0
        %353 = vmatpush1.msra.mxu0 0.0
        %354 = vmatprep.subr.mxu0 0.0
        %355 = vmatpush1.msra.mxu0 0.0
        %356 = vmatprep.subr.mxu0 0.0
        %357 = vmatpush1.msra.mxu0 0.0
        %358 = vmatprep.subr.mxu0 0.0
        %359 = vmatpush1.msra.mxu0 0.0
        %360 = vmatprep.subr.mxu0 0.0
        %361 = vmatpush1.msra.mxu0 0.0
        %362 = vmatprep.subr.mxu0 0.0
        %363 = vmatpush1.msra.mxu0 0.0
        %364 = vmatprep.subr.mxu0 0.0
        %365 = vmatpush1.msra.mxu0 0.0
        %366 = vmatprep.subr.mxu0 0.0
        %367 = vmatpush1.msra.mxu0 0.0
        %368 = vmatprep.subr.mxu0 0.0
        %369 = vmatpush1.msra.mxu0 0.0
        %370 = vmatprep.subr.mxu0 0.0
        %371 = vmatpush1.msra.mxu0 0.0
        %372 = vmatprep.subr.mxu0 0.0
        %373 = vmatpush1.msra.mxu0 0.0
        %374 = vmatprep.subr.mxu0 0.0
        %375 = vmatpush1.msra.mxu0 0.0
        %376 = vmatprep.subr.mxu0 0.0
        %377 = vmatpush1.msra.mxu0 0.0
        %378 = vmatprep.subr.mxu0 0.0
        %379 = vmatpush1.msra.mxu0 0.0
        %380 = vmatprep.subr.mxu0 0.0
        %381 = vmatpush1.msra.mxu0 0.0
        %382 = vmatprep.subr.mxu0 0.0
        %383 = vmatpush1.msra.mxu0 0.0
        %384 = vmatprep.subr.mxu0 0.0
        %385 = vmatpush1.msra.mxu0 0.0
        %386 = vmatprep.subr.mxu0 0.0
        %387 = vmatpush1.msra.mxu0 0.0
        %388 = vmatprep.subr.mxu0 0.0
        %389 = vmatpush1.msra.mxu0 0.0
        %390 = vmatprep.mubr.f32.mxu0 0.0
        %391 = vmatmul.mubr.f32.gmra.mrb[0].mxu0 %v312
        %v392 = vpop.f32.mrb[0].mxu0
        %v393 = vadd.f32 0.0, %v392
        %v394 = vpop.f32.mrb[0].mxu0
        %395 = vmatprep.mubr.f32.mxu0 0.0
        %396 = vmatmul.mubr.f32.gmra.mrb[0].mxu0 %v315
        %v397 = vpop.f32.mrb[0].mxu0
        %v398 = vadd.f32 0.0, %v397
        %v399 = vpop.f32.mrb[0].mxu0
        %400 = vmatprep.mubr.f32.mxu0 0.0
        %401 = vmatmul.mubr.f32.gmra.mrb[0].mxu0 %v318
        %v402 = vpop.f32.mrb[0].mxu0
        %v403 = vadd.f32 0.0, %v402
        %v404 = vpop.f32.mrb[0].mxu0
        %405 = vmatprep.mubr.f32.mxu0 0.0
        %406 = vmatmul.mubr.f32.gmra.mrb[0].mxu0 %v321
        %v407 = vpop.f32.mrb[0].mxu0
        %v408 = vadd.f32 0.0, %v407
        %v409 = vpop.f32.mrb[0].mxu0
        %410 = vmatprep.mubr.f32.mxu0 0.0
        %411 = vmatmul.mubr.f32.gmra.mrb[0].mxu0 %v324
        %v412 = vpop.f32.mrb[0].mxu0
        %v413 = vadd.f32 0.0, %v412
        %v414 = vpop.f32.mrb[0].mxu0
        %415 = vdwg.mxu0
        %v416 = vlaneseq
        %v417 = vshrl.u32 %v416, 7
        %v418 = vadd.s32 %v417, 8
        %v419 = vadd.s32 %v417, 16
        %v420 = vadd.s32 %v417, 24
        %v421 = vadd.s32 %v417, 32
        %v422 = vlaneseq
        %v423 = vand.u32 %v422, 127
        %vm424 = vcmp.ge.s32.totalorder %v417, 0
        %vm425 = vcmp.ge.s32.totalorder %v418, 0
        %vm426 = vcmp.ge.s32.totalorder %v419, 0
        %vm427 = vcmp.ge.s32.totalorder %v420, 0
        %vm428 = vcmp.ge.s32.totalorder %v421, 0
        %vm429 = vcmp.lt.s32.totalorder %v417, 32
        %vm430 = vcmp.lt.s32.totalorder %v418, 32
        %vm431 = vcmp.lt.s32.totalorder %v419, 32
        %vm432 = vcmp.lt.s32.totalorder %v420, 32
        %vm433 = vcmp.lt.s32.totalorder %v421, 32
        %vm434 = vmand %vm424, %vm429
        %vm435 = vmand %vm425, %vm430
        %vm436 = vmand %vm426, %vm431
        %vm437 = vmand %vm427, %vm432
        %vm438 = vmand %vm428, %vm433
        %vm439 = vcmp.ge.s32.totalorder %v423, 0
        %vm440 = vmand %vm434, %vm439
        %vm441 = vmand %vm435, %vm439
        %vm442 = vmand %vm436, %vm439
        %vm443 = vmand %vm437, %vm439
        %vm444 = vmand %vm438, %vm439
        %vm445 = vcmp.lt.s32.totalorder %v423, 24
        %vm446 = vmand %vm440, %vm445
        %vm447 = vmand %vm441, %vm445
        %vm448 = vmand %vm442, %vm445
        %vm449 = vmand %vm443, %vm445
        %vm450 = vmand %vm444, %vm445
        %v451 = vsel %vm446, %v393, -1.0
        %v452 = vsel %vm447, %v398, -1.0
        %v453 = vsel %vm448, %v403, -1.0
        %v454 = vsel %vm449, %v408, -1.0
        %v455 = vsel %vm450, %v413, -1.0
        %vm456 = vcmask 195584
        %457 = vst.msk [vmem:[%s194] sm:$0xff] %vm456, %v451
        %458 = vst.msk [vmem:[%s194 + $0x8] sm:$0xff] %vm456, %v452
        %459 = vst.msk [vmem:[%s194 + $0x10] sm:$0xff] %vm456, %v453
        %460 = vst.msk [vmem:[%s194 + $0x18] sm:$0xff] %vm456, %v454
        %461 = vst.msk [vmem:[%s194 + $0x20] sm:$0xff] %vm456, %v455
        %s462 = scalar_lea.vmem %s164, 16 [#allocation2]
        %v463 = vld [vmem:[%s462] sm:$0xff]
        %v464 = vld [vmem:[%s462 + $0x8] sm:$0xff]
        %465 = vmatprep.subr.mxu0 0.0
        %466 = vmatpush1.msra.mxu0 %v463
        %467 = vmatprep.subr.mxu0 0.0
        %468 = vmatpush1.msra.mxu0 %v464
        %469 = vmatprep.subr.mxu0 0.0
        %470 = vmatpush1.msra.mxu0 0.0
        %471 = vmatprep.subr.mxu0 0.0
        %472 = vmatpush1.msra.mxu0 0.0
        %473 = vmatprep.subr.mxu0 0.0
        %474 = vmatpush1.msra.mxu0 0.0
        %475 = vmatprep.subr.mxu0 0.0
        %476 = vmatpush1.msra.mxu0 0.0
        %477 = vmatprep.subr.mxu0 0.0
        %478 = vmatpush1.msra.mxu0 0.0
        %479 = vmatprep.subr.mxu0 0.0
        %480 = vmatpush1.msra.mxu0 0.0
        %481 = vmatprep.subr.mxu0 0.0
        %482 = vmatpush1.msra.mxu0 0.0
        %483 = vmatprep.subr.mxu0 0.0
        %484 = vmatpush1.msra.mxu0 0.0
        %485 = vmatprep.subr.mxu0 0.0
        %486 = vmatpush1.msra.mxu0 0.0
        %487 = vmatprep.subr.mxu0 0.0
        %488 = vmatpush1.msra.mxu0 0.0
        %489 = vmatprep.subr.mxu0 0.0
        %490 = vmatpush1.msra.mxu0 0.0
        %491 = vmatprep.subr.mxu0 0.0
        %492 = vmatpush1.msra.mxu0 0.0
        %493 = vmatprep.subr.mxu0 0.0
        %494 = vmatpush1.msra.mxu0 0.0
        %495 = vmatprep.subr.mxu0 0.0
        %496 = vmatpush1.msra.mxu0 0.0
        %497 = vmatprep.subr.mxu0 0.0
        %498 = vmatpush1.msra.mxu0 0.0
        %499 = vmatprep.subr.mxu0 0.0
        %500 = vmatpush1.msra.mxu0 0.0
        %501 = vmatprep.subr.mxu0 0.0
        %502 = vmatpush1.msra.mxu0 0.0
        %503 = vmatprep.subr.mxu0 0.0
        %504 = vmatpush1.msra.mxu0 0.0
        %505 = vmatprep.subr.mxu0 0.0
        %506 = vmatpush1.msra.mxu0 0.0
        %507 = vmatprep.subr.mxu0 0.0
        %508 = vmatpush1.msra.mxu0 0.0
        %509 = vmatprep.subr.mxu0 0.0
        %510 = vmatpush1.msra.mxu0 0.0
        %511 = vmatprep.subr.mxu0 0.0
        %512 = vmatpush1.msra.mxu0 0.0
        %513 = vmatprep.subr.mxu0 0.0
        %514 = vmatpush1.msra.mxu0 0.0
        %515 = vmatprep.subr.mxu0 0.0
        %516 = vmatpush1.msra.mxu0 0.0
        %517 = vmatprep.subr.mxu0 0.0
        %518 = vmatpush1.msra.mxu0 0.0
        %519 = vmatprep.subr.mxu0 0.0
        %520 = vmatpush1.msra.mxu0 0.0
        %521 = vmatprep.subr.mxu0 0.0
        %522 = vmatpush1.msra.mxu0 0.0
        %523 = vmatprep.subr.mxu0 0.0
        %524 = vmatpush1.msra.mxu0 0.0
        %525 = vmatprep.subr.mxu0 0.0
        %526 = vmatpush1.msra.mxu0 0.0
        %527 = vmatprep.subr.mxu0 0.0
        %528 = vmatpush1.msra.mxu0 0.0
        %529 = vmatprep.mubr.f32.mxu0 0.0
        %530 = vmatmul.mubr.f32.gmra.mrb[0].mxu0 %v205
        %v531 = vpop.f32.mrb[0].mxu0
        %v532 = vadd.f32 0.0, %v531
        %v533 = vpop.f32.mrb[0].mxu0
        %534 = vmatprep.mubr.f32.mxu0 0.0
        %535 = vmatmul.mubr.f32.gmra.mrb[0].mxu0 %v208
        %v536 = vpop.f32.mrb[0].mxu0
        %v537 = vadd.f32 0.0, %v536
        %v538 = vpop.f32.mrb[0].mxu0
        %539 = vmatprep.mubr.f32.mxu0 0.0
        %540 = vmatmul.mubr.f32.gmra.mrb[0].mxu0 %v211
        %v541 = vpop.f32.mrb[0].mxu0
        %v542 = vadd.f32 0.0, %v541
        %v543 = vpop.f32.mrb[0].mxu0
        %544 = vmatprep.mubr.f32.mxu0 0.0
        %545 = vmatmul.mubr.f32.gmra.mrb[0].mxu0 %v214
        %v546 = vpop.f32.mrb[0].mxu0
        %v547 = vadd.f32 0.0, %v546
        %v548 = vpop.f32.mrb[0].mxu0
        %549 = vmatprep.mubr.f32.mxu0 0.0
        %550 = vmatmul.mubr.f32.gmra.mrb[0].mxu0 %v217
        %v551 = vpop.f32.mrb[0].mxu0
        %v552 = vadd.f32 0.0, %v551
        %v553 = vpop.f32.mrb[0].mxu0
        %554 = vdwg.mxu0
        %v555 = vld [vmem:[%s2] sm:$0xff]
        %v556 = vld [vmem:[%s2 + $0x8] sm:$0xff]
        %v558 = vsel %vm203, %v532, 0
        %v561 = vsel %vm203, %v537, 0
        %v564 = vsel %vm203, %v542, 0
        %v567 = vsel %vm203, %v547, 0
        %v570 = vsel %vm203, %v552, 0
        %572 = vmatprep.subr.mxu0 0.0
        %573 = vmatpush1.msra.mxu0 %v555
        %574 = vmatprep.subr.mxu0 0.0
        %575 = vmatpush1.msra.mxu0 %v556
        %576 = vmatprep.subr.mxu0 0.0
        %577 = vmatpush1.msra.mxu0 0.0
        %578 = vmatprep.subr.mxu0 0.0
        %579 = vmatpush1.msra.mxu0 0.0
        %580 = vmatprep.subr.mxu0 0.0
        %581 = vmatpush1.msra.mxu0 0.0
        %582 = vmatprep.subr.mxu0 0.0
        %583 = vmatpush1.msra.mxu0 0.0
        %584 = vmatprep.subr.mxu0 0.0
        %585 = vmatpush1.msra.mxu0 0.0
        %586 = vmatprep.subr.mxu0 0.0
        %587 = vmatpush1.msra.mxu0 0.0
        %588 = vmatprep.subr.mxu0 0.0
        %589 = vmatpush1.msra.mxu0 0.0
        %590 = vmatprep.subr.mxu0 0.0
        %591 = vmatpush1.msra.mxu0 0.0
        %592 = vmatprep.subr.mxu0 0.0
        %593 = vmatpush1.msra.mxu0 0.0
        %594 = vmatprep.subr.mxu0 0.0
        %595 = vmatpush1.msra.mxu0 0.0
        %596 = vmatprep.subr.mxu0 0.0
        %597 = vmatpush1.msra.mxu0 0.0
        %598 = vmatprep.subr.mxu0 0.0
        %599 = vmatpush1.msra.mxu0 0.0
        %600 = vmatprep.subr.mxu0 0.0
        %601 = vmatpush1.msra.mxu0 0.0
        %602 = vmatprep.subr.mxu0 0.0
        %603 = vmatpush1.msra.mxu0 0.0
        %604 = vmatprep.subr.mxu0 0.0
        %605 = vmatpush1.msra.mxu0 0.0
        %606 = vmatprep.subr.mxu0 0.0
        %607 = vmatpush1.msra.mxu0 0.0
        %608 = vmatprep.subr.mxu0 0.0
        %609 = vmatpush1.msra.mxu0 0.0
        %610 = vmatprep.subr.mxu0 0.0
        %611 = vmatpush1.msra.mxu0 0.0
        %612 = vmatprep.subr.mxu0 0.0
        %613 = vmatpush1.msra.mxu0 0.0
        %614 = vmatprep.subr.mxu0 0.0
        %615 = vmatpush1.msra.mxu0 0.0
        %616 = vmatprep.subr.mxu0 0.0
        %617 = vmatpush1.msra.mxu0 0.0
        %618 = vmatprep.subr.mxu0 0.0
        %619 = vmatpush1.msra.mxu0 0.0
        %620 = vmatprep.subr.mxu0 0.0
        %621 = vmatpush1.msra.mxu0 0.0
        %622 = vmatprep.subr.mxu0 0.0
        %623 = vmatpush1.msra.mxu0 0.0
        %624 = vmatprep.subr.mxu0 0.0
        %625 = vmatpush1.msra.mxu0 0.0
        %626 = vmatprep.subr.mxu0 0.0
        %627 = vmatpush1.msra.mxu0 0.0
        %628 = vmatprep.subr.mxu0 0.0
        %629 = vmatpush1.msra.mxu0 0.0
        %630 = vmatprep.subr.mxu0 0.0
        %631 = vmatpush1.msra.mxu0 0.0
        %632 = vmatprep.subr.mxu0 0.0
        %633 = vmatpush1.msra.mxu0 0.0
        %634 = vmatprep.subr.mxu0 0.0
        %635 = vmatpush1.msra.mxu0 0.0
        %636 = vmatprep.mubr.f32.mxu0 0.0
        %637 = vmatmul.mubr.f32.gmra.mrb[0].mxu0 %v558
        %v638 = vpop.f32.mrb[0].mxu0
        %v639 = vadd.f32 0.0, %v638
        %v640 = vpop.f32.mrb[0].mxu0
        %641 = vmatprep.mubr.f32.mxu0 0.0
        %642 = vmatmul.mubr.f32.gmra.mrb[0].mxu0 %v561
        %v643 = vpop.f32.mrb[0].mxu0
        %v644 = vadd.f32 0.0, %v643
        %v645 = vpop.f32.mrb[0].mxu0
        %646 = vmatprep.mubr.f32.mxu0 0.0
        %647 = vmatmul.mubr.f32.gmra.mrb[0].mxu0 %v564
        %v648 = vpop.f32.mrb[0].mxu0
        %v649 = vadd.f32 0.0, %v648
        %v650 = vpop.f32.mrb[0].mxu0
        %651 = vmatprep.mubr.f32.mxu0 0.0
        %652 = vmatmul.mubr.f32.gmra.mrb[0].mxu0 %v567
        %v653 = vpop.f32.mrb[0].mxu0
        %v654 = vadd.f32 0.0, %v653
        %v655 = vpop.f32.mrb[0].mxu0
        %656 = vmatprep.mubr.f32.mxu0 0.0
        %657 = vmatmul.mubr.f32.gmra.mrb[0].mxu0 %v570
        %v658 = vpop.f32.mrb[0].mxu0
        %v659 = vadd.f32 0.0, %v658
        %v660 = vpop.f32.mrb[0].mxu0
        %661 = vdwg.mxu0
        %v662 = vsel %vm446, %v639, -1.0
        %v663 = vsel %vm447, %v644, -1.0
        %v664 = vsel %vm448, %v649, -1.0
        %v665 = vsel %vm449, %v654, -1.0
        %v666 = vsel %vm450, %v659, -1.0
        %s667 = scalar_lea.vmem %s194, 40
        %668 = vst.msk [vmem:[%s667] sm:$0xff] %vm456, %v662
        %669 = vst.msk [vmem:[%s667 + $0x8] sm:$0xff] %vm456, %v663
        %670 = vst.msk [vmem:[%s667 + $0x10] sm:$0xff] %vm456, %v664
        %671 = vst.msk [vmem:[%s667 + $0x18] sm:$0xff] %vm456, %v665
        %672 = vst.msk [vmem:[%s667 + $0x20] sm:$0xff] %vm456, %v666
        %s673 = scalar_lea.vmem %s164, 32 [#allocation2]
        %v674 = vld [vmem:[%s673] sm:$0xff]
        %v675 = vld [vmem:[%s673 + $0x8] sm:$0xff]
        %676 = vmatprep.subr.mxu0 0.0
        %677 = vmatpush1.msra.mxu0 %v674
        %678 = vmatprep.subr.mxu0 0.0
        %679 = vmatpush1.msra.mxu0 %v675
        %680 = vmatprep.subr.mxu0 0.0
        %681 = vmatpush1.msra.mxu0 0.0
        %682 = vmatprep.subr.mxu0 0.0
        %683 = vmatpush1.msra.mxu0 0.0
        %684 = vmatprep.subr.mxu0 0.0
        %685 = vmatpush1.msra.mxu0 0.0
        %686 = vmatprep.subr.mxu0 0.0
        %687 = vmatpush1.msra.mxu0 0.0
        %688 = vmatprep.subr.mxu0 0.0
        %689 = vmatpush1.msra.mxu0 0.0
        %690 = vmatprep.subr.mxu0 0.0
        %691 = vmatpush1.msra.mxu0 0.0
        %692 = vmatprep.subr.mxu0 0.0
        %693 = vmatpush1.msra.mxu0 0.0
        %694 = vmatprep.subr.mxu0 0.0
        %695 = vmatpush1.msra.mxu0 0.0
        %696 = vmatprep.subr.mxu0 0.0
        %697 = vmatpush1.msra.mxu0 0.0
        %698 = vmatprep.subr.mxu0 0.0
        %699 = vmatpush1.msra.mxu0 0.0
        %700 = vmatprep.subr.mxu0 0.0
        %701 = vmatpush1.msra.mxu0 0.0
        %702 = vmatprep.subr.mxu0 0.0
        %703 = vmatpush1.msra.mxu0 0.0
        %704 = vmatprep.subr.mxu0 0.0
        %705 = vmatpush1.msra.mxu0 0.0
        %706 = vmatprep.subr.mxu0 0.0
        %707 = vmatpush1.msra.mxu0 0.0
        %708 = vmatprep.subr.mxu0 0.0
        %709 = vmatpush1.msra.mxu0 0.0
        %710 = vmatprep.subr.mxu0 0.0
        %711 = vmatpush1.msra.mxu0 0.0
        %712 = vmatprep.subr.mxu0 0.0
        %713 = vmatpush1.msra.mxu0 0.0
        %714 = vmatprep.subr.mxu0 0.0
        %715 = vmatpush1.msra.mxu0 0.0
        %716 = vmatprep.subr.mxu0 0.0
        %717 = vmatpush1.msra.mxu0 0.0
        %718 = vmatprep.subr.mxu0 0.0
        %719 = vmatpush1.msra.mxu0 0.0
        %720 = vmatprep.subr.mxu0 0.0
        %721 = vmatpush1.msra.mxu0 0.0
        %722 = vmatprep.subr.mxu0 0.0
        %723 = vmatpush1.msra.mxu0 0.0
        %724 = vmatprep.subr.mxu0 0.0
        %725 = vmatpush1.msra.mxu0 0.0
        %726 = vmatprep.subr.mxu0 0.0
        %727 = vmatpush1.msra.mxu0 0.0
        %728 = vmatprep.subr.mxu0 0.0
        %729 = vmatpush1.msra.mxu0 0.0
        %730 = vmatprep.subr.mxu0 0.0
        %731 = vmatpush1.msra.mxu0 0.0
        %732 = vmatprep.subr.mxu0 0.0
        %733 = vmatpush1.msra.mxu0 0.0
        %734 = vmatprep.subr.mxu0 0.0
        %735 = vmatpush1.msra.mxu0 0.0
        %736 = vmatprep.subr.mxu0 0.0
        %737 = vmatpush1.msra.mxu0 0.0
        %738 = vmatprep.subr.mxu0 0.0
        %739 = vmatpush1.msra.mxu0 0.0
        %740 = vmatprep.mubr.f32.mxu0 0.0
        %741 = vmatmul.mubr.f32.gmra.mrb[0].mxu0 %v205
        %v742 = vpop.f32.mrb[0].mxu0
        %v743 = vadd.f32 0.0, %v742
        %v744 = vpop.f32.mrb[0].mxu0
        %745 = vmatprep.mubr.f32.mxu0 0.0
        %746 = vmatmul.mubr.f32.gmra.mrb[0].mxu0 %v208
        %v747 = vpop.f32.mrb[0].mxu0
        %v748 = vadd.f32 0.0, %v747
        %v749 = vpop.f32.mrb[0].mxu0
        %750 = vmatprep.mubr.f32.mxu0 0.0
        %751 = vmatmul.mubr.f32.gmra.mrb[0].mxu0 %v211
        %v752 = vpop.f32.mrb[0].mxu0
        %v753 = vadd.f32 0.0, %v752
        %v754 = vpop.f32.mrb[0].mxu0
        %755 = vmatprep.mubr.f32.mxu0 0.0
        %756 = vmatmul.mubr.f32.gmra.mrb[0].mxu0 %v214
        %v757 = vpop.f32.mrb[0].mxu0
        %v758 = vadd.f32 0.0, %v757
        %v759 = vpop.f32.mrb[0].mxu0
        %760 = vmatprep.mubr.f32.mxu0 0.0
        %761 = vmatmul.mubr.f32.gmra.mrb[0].mxu0 %v217
        %v762 = vpop.f32.mrb[0].mxu0
        %v763 = vadd.f32 0.0, %v762
        %v764 = vpop.f32.mrb[0].mxu0
        %765 = vdwg.mxu0
        %v766 = vld [vmem:[%s2] sm:$0xff]
        %v767 = vld [vmem:[%s2 + $0x8] sm:$0xff]
        %v769 = vsel %vm203, %v743, 0
        %v772 = vsel %vm203, %v748, 0
        %v775 = vsel %vm203, %v753, 0
        %v778 = vsel %vm203, %v758, 0
        %v781 = vsel %vm203, %v763, 0
        %783 = vmatprep.subr.mxu0 0.0
        %784 = vmatpush1.msra.mxu0 %v766
        %785 = vmatprep.subr.mxu0 0.0
        %786 = vmatpush1.msra.mxu0 %v767
        %787 = vmatprep.subr.mxu0 0.0
        %788 = vmatpush1.msra.mxu0 0.0
        %789 = vmatprep.subr.mxu0 0.0
        %790 = vmatpush1.msra.mxu0 0.0
        %791 = vmatprep.subr.mxu0 0.0
        %792 = vmatpush1.msra.mxu0 0.0
        %793 = vmatprep.subr.mxu0 0.0
        %794 = vmatpush1.msra.mxu0 0.0
        %795 = vmatprep.subr.mxu0 0.0
        %796 = vmatpush1.msra.mxu0 0.0
        %797 = vmatprep.subr.mxu0 0.0
        %798 = vmatpush1.msra.mxu0 0.0
        %799 = vmatprep.subr.mxu0 0.0
        %800 = vmatpush1.msra.mxu0 0.0
        %801 = vmatprep.subr.mxu0 0.0
        %802 = vmatpush1.msra.mxu0 0.0
        %803 = vmatprep.subr.mxu0 0.0
        %804 = vmatpush1.msra.mxu0 0.0
        %805 = vmatprep.subr.mxu0 0.0
        %806 = vmatpush1.msra.mxu0 0.0
        %807 = vmatprep.subr.mxu0 0.0
        %808 = vmatpush1.msra.mxu0 0.0
        %809 = vmatprep.subr.mxu0 0.0
        %810 = vmatpush1.msra.mxu0 0.0
        %811 = vmatprep.subr.mxu0 0.0
        %812 = vmatpush1.msra.mxu0 0.0
        %813 = vmatprep.subr.mxu0 0.0
        %814 = vmatpush1.msra.mxu0 0.0
        %815 = vmatprep.subr.mxu0 0.0
        %816 = vmatpush1.msra.mxu0 0.0
        %817 = vmatprep.subr.mxu0 0.0
        %818 = vmatpush1.msra.mxu0 0.0
        %819 = vmatprep.subr.mxu0 0.0
        %820 = vmatpush1.msra.mxu0 0.0
        %821 = vmatprep.subr.mxu0 0.0
        %822 = vmatpush1.msra.mxu0 0.0
        %823 = vmatprep.subr.mxu0 0.0
        %824 = vmatpush1.msra.mxu0 0.0
        %825 = vmatprep.subr.mxu0 0.0
        %826 = vmatpush1.msra.mxu0 0.0
        %827 = vmatprep.subr.mxu0 0.0
        %828 = vmatpush1.msra.mxu0 0.0
        %829 = vmatprep.subr.mxu0 0.0
        %830 = vmatpush1.msra.mxu0 0.0
        %831 = vmatprep.subr.mxu0 0.0
        %832 = vmatpush1.msra.mxu0 0.0
        %833 = vmatprep.subr.mxu0 0.0
        %834 = vmatpush1.msra.mxu0 0.0
        %835 = vmatprep.subr.mxu0 0.0
        %836 = vmatpush1.msra.mxu0 0.0
        %837 = vmatprep.subr.mxu0 0.0
        %838 = vmatpush1.msra.mxu0 0.0
        %839 = vmatprep.subr.mxu0 0.0
        %840 = vmatpush1.msra.mxu0 0.0
        %841 = vmatprep.subr.mxu0 0.0
        %842 = vmatpush1.msra.mxu0 0.0
        %843 = vmatprep.subr.mxu0 0.0
        %844 = vmatpush1.msra.mxu0 0.0
        %845 = vmatprep.subr.mxu0 0.0
        %846 = vmatpush1.msra.mxu0 0.0
        %847 = vmatprep.mubr.f32.mxu0 0.0
        %848 = vmatmul.mubr.f32.gmra.mrb[0].mxu0 %v769
        %v849 = vpop.f32.mrb[0].mxu0
        %v850 = vadd.f32 0.0, %v849
        %v851 = vpop.f32.mrb[0].mxu0
        %852 = vmatprep.mubr.f32.mxu0 0.0
        %853 = vmatmul.mubr.f32.gmra.mrb[0].mxu0 %v772
        %v854 = vpop.f32.mrb[0].mxu0
        %v855 = vadd.f32 0.0, %v854
        %v856 = vpop.f32.mrb[0].mxu0
        %857 = vmatprep.mubr.f32.mxu0 0.0
        %858 = vmatmul.mubr.f32.gmra.mrb[0].mxu0 %v775
        %v859 = vpop.f32.mrb[0].mxu0
        %v860 = vadd.f32 0.0, %v859
        %v861 = vpop.f32.mrb[0].mxu0
        %862 = vmatprep.mubr.f32.mxu0 0.0
        %863 = vmatmul.mubr.f32.gmra.mrb[0].mxu0 %v778
        %v864 = vpop.f32.mrb[0].mxu0
        %v865 = vadd.f32 0.0, %v864
        %v866 = vpop.f32.mrb[0].mxu0
        %867 = vmatprep.mubr.f32.mxu0 0.0
        %868 = vmatmul.mubr.f32.gmra.mrb[0].mxu0 %v781
        %v869 = vpop.f32.mrb[0].mxu0
        %v870 = vadd.f32 0.0, %v869
        %v871 = vpop.f32.mrb[0].mxu0
        %872 = vdwg.mxu0
        %v873 = vsel %vm446, %v850, -1.0
        %v874 = vsel %vm447, %v855, -1.0
        %v875 = vsel %vm448, %v860, -1.0
        %v876 = vsel %vm449, %v865, -1.0
        %v877 = vsel %vm450, %v870, -1.0
        %s878 = scalar_lea.vmem %s194, 80
        %879 = vst.msk [vmem:[%s878] sm:$0xff] %vm456, %v873
        %880 = vst.msk [vmem:[%s878 + $0x8] sm:$0xff] %vm456, %v874
        %881 = vst.msk [vmem:[%s878 + $0x10] sm:$0xff] %vm456, %v875
        %882 = vst.msk [vmem:[%s878 + $0x18] sm:$0xff] %vm456, %v876
        %883 = vst.msk [vmem:[%s878 + $0x20] sm:$0xff] %vm456, %v877
        %s884 = scalar_lea.vmem %s164, 48 [#allocation2]
        %v885 = vld [vmem:[%s884] sm:$0xff]
        %v886 = vld [vmem:[%s884 + $0x8] sm:$0xff]
        %887 = vmatprep.subr.mxu0 0.0
        %888 = vmatpush1.msra.mxu0 %v885
        %889 = vmatprep.subr.mxu0 0.0
        %890 = vmatpush1.msra.mxu0 %v886
        %891 = vmatprep.subr.mxu0 0.0
        %892 = vmatpush1.msra.mxu0 0.0
        %893 = vmatprep.subr.mxu0 0.0
        %894 = vmatpush1.msra.mxu0 0.0
        %895 = vmatprep.subr.mxu0 0.0
        %896 = vmatpush1.msra.mxu0 0.0
        %897 = vmatprep.subr.mxu0 0.0
        %898 = vmatpush1.msra.mxu0 0.0
        %899 = vmatprep.subr.mxu0 0.0
        %900 = vmatpush1.msra.mxu0 0.0
        %901 = vmatprep.subr.mxu0 0.0
        %902 = vmatpush1.msra.mxu0 0.0
        %903 = vmatprep.subr.mxu0 0.0
        %904 = vmatpush1.msra.mxu0 0.0
        %905 = vmatprep.subr.mxu0 0.0
        %906 = vmatpush1.msra.mxu0 0.0
        %907 = vmatprep.subr.mxu0 0.0
        %908 = vmatpush1.msra.mxu0 0.0
        %909 = vmatprep.subr.mxu0 0.0
        %910 = vmatpush1.msra.mxu0 0.0
        %911 = vmatprep.subr.mxu0 0.0
        %912 = vmatpush1.msra.mxu0 0.0
        %913 = vmatprep.subr.mxu0 0.0
        %914 = vmatpush1.msra.mxu0 0.0
        %915 = vmatprep.subr.mxu0 0.0
        %916 = vmatpush1.msra.mxu0 0.0
        %917 = vmatprep.subr.mxu0 0.0
        %918 = vmatpush1.msra.mxu0 0.0
        %919 = vmatprep.subr.mxu0 0.0
        %920 = vmatpush1.msra.mxu0 0.0
        %921 = vmatprep.subr.mxu0 0.0
        %922 = vmatpush1.msra.mxu0 0.0
        %923 = vmatprep.subr.mxu0 0.0
        %924 = vmatpush1.msra.mxu0 0.0
        %925 = vmatprep.subr.mxu0 0.0
        %926 = vmatpush1.msra.mxu0 0.0
        %927 = vmatprep.subr.mxu0 0.0
        %928 = vmatpush1.msra.mxu0 0.0
        %929 = vmatprep.subr.mxu0 0.0
        %930 = vmatpush1.msra.mxu0 0.0
        %931 = vmatprep.subr.mxu0 0.0
        %932 = vmatpush1.msra.mxu0 0.0
        %933 = vmatprep.subr.mxu0 0.0
        %934 = vmatpush1.msra.mxu0 0.0
        %935 = vmatprep.subr.mxu0 0.0
        %936 = vmatpush1.msra.mxu0 0.0
        %937 = vmatprep.subr.mxu0 0.0
        %938 = vmatpush1.msra.mxu0 0.0
        %939 = vmatprep.subr.mxu0 0.0
        %940 = vmatpush1.msra.mxu0 0.0
        %941 = vmatprep.subr.mxu0 0.0
        %942 = vmatpush1.msra.mxu0 0.0
        %943 = vmatprep.subr.mxu0 0.0
        %944 = vmatpush1.msra.mxu0 0.0
        %945 = vmatprep.subr.mxu0 0.0
        %946 = vmatpush1.msra.mxu0 0.0
        %947 = vmatprep.subr.mxu0 0.0
        %948 = vmatpush1.msra.mxu0 0.0
        %949 = vmatprep.subr.mxu0 0.0
        %950 = vmatpush1.msra.mxu0 0.0
        %951 = vmatprep.mubr.f32.mxu0 0.0
        %952 = vmatmul.mubr.f32.gmra.mrb[0].mxu0 %v205
        %v953 = vpop.f32.mrb[0].mxu0
        %v954 = vadd.f32 0.0, %v953
        %v955 = vpop.f32.mrb[0].mxu0
        %956 = vmatprep.mubr.f32.mxu0 0.0
        %957 = vmatmul.mubr.f32.gmra.mrb[0].mxu0 %v208
        %v958 = vpop.f32.mrb[0].mxu0
        %v959 = vadd.f32 0.0, %v958
        %v960 = vpop.f32.mrb[0].mxu0
        %961 = vmatprep.mubr.f32.mxu0 0.0
        %962 = vmatmul.mubr.f32.gmra.mrb[0].mxu0 %v211
        %v963 = vpop.f32.mrb[0].mxu0
        %v964 = vadd.f32 0.0, %v963
        %v965 = vpop.f32.mrb[0].mxu0
        %966 = vmatprep.mubr.f32.mxu0 0.0
        %967 = vmatmul.mubr.f32.gmra.mrb[0].mxu0 %v214
        %v968 = vpop.f32.mrb[0].mxu0
        %v969 = vadd.f32 0.0, %v968
        %v970 = vpop.f32.mrb[0].mxu0
        %971 = vmatprep.mubr.f32.mxu0 0.0
        %972 = vmatmul.mubr.f32.gmra.mrb[0].mxu0 %v217
        %v973 = vpop.f32.mrb[0].mxu0
        %v974 = vadd.f32 0.0, %v973
        %v975 = vpop.f32.mrb[0].mxu0
        %976 = vdwg.mxu0
        %v977 = vld [vmem:[%s2] sm:$0xff]
        %v978 = vld [vmem:[%s2 + $0x8] sm:$0xff]
        %v980 = vsel %vm203, %v954, 0
        %v983 = vsel %vm203, %v959, 0
        %v986 = vsel %vm203, %v964, 0
        %v989 = vsel %vm203, %v969, 0
        %v992 = vsel %vm203, %v974, 0
        %994 = vmatprep.subr.mxu0 0.0
        %995 = vmatpush1.msra.mxu0 %v977
        %996 = vmatprep.subr.mxu0 0.0
        %997 = vmatpush1.msra.mxu0 %v978
        %998 = vmatprep.subr.mxu0 0.0
        %999 = vmatpush1.msra.mxu0 0.0
        %1000 = vmatprep.subr.mxu0 0.0
        %1001 = vmatpush1.msra.mxu0 0.0
        %1002 = vmatprep.subr.mxu0 0.0
        %1003 = vmatpush1.msra.mxu0 0.0
        %1004 = vmatprep.subr.mxu0 0.0
        %1005 = vmatpush1.msra.mxu0 0.0
        %1006 = vmatprep.subr.mxu0 0.0
        %1007 = vmatpush1.msra.mxu0 0.0
        %1008 = vmatprep.subr.mxu0 0.0
        %1009 = vmatpush1.msra.mxu0 0.0
        %1010 = vmatprep.subr.mxu0 0.0
        %1011 = vmatpush1.msra.mxu0 0.0
        %1012 = vmatprep.subr.mxu0 0.0
        %1013 = vmatpush1.msra.mxu0 0.0
        %1014 = vmatprep.subr.mxu0 0.0
        %1015 = vmatpush1.msra.mxu0 0.0
        %1016 = vmatprep.subr.mxu0 0.0
        %1017 = vmatpush1.msra.mxu0 0.0
        %1018 = vmatprep.subr.mxu0 0.0
        %1019 = vmatpush1.msra.mxu0 0.0
        %1020 = vmatprep.subr.mxu0 0.0
        %1021 = vmatpush1.msra.mxu0 0.0
        %1022 = vmatprep.subr.mxu0 0.0
        %1023 = vmatpush1.msra.mxu0 0.0
        %1024 = vmatprep.subr.mxu0 0.0
        %1025 = vmatpush1.msra.mxu0 0.0
        %1026 = vmatprep.subr.mxu0 0.0
        %1027 = vmatpush1.msra.mxu0 0.0
        %1028 = vmatprep.subr.mxu0 0.0
        %1029 = vmatpush1.msra.mxu0 0.0
        %1030 = vmatprep.subr.mxu0 0.0
        %1031 = vmatpush1.msra.mxu0 0.0
        %1032 = vmatprep.subr.mxu0 0.0
        %1033 = vmatpush1.msra.mxu0 0.0
        %1034 = vmatprep.subr.mxu0 0.0
        %1035 = vmatpush1.msra.mxu0 0.0
        %1036 = vmatprep.subr.mxu0 0.0
        %1037 = vmatpush1.msra.mxu0 0.0
        %1038 = vmatprep.subr.mxu0 0.0
        %1039 = vmatpush1.msra.mxu0 0.0
        %1040 = vmatprep.subr.mxu0 0.0
        %1041 = vmatpush1.msra.mxu0 0.0
        %1042 = vmatprep.subr.mxu0 0.0
        %1043 = vmatpush1.msra.mxu0 0.0
        %1044 = vmatprep.subr.mxu0 0.0
        %1045 = vmatpush1.msra.mxu0 0.0
        %1046 = vmatprep.subr.mxu0 0.0
        %1047 = vmatpush1.msra.mxu0 0.0
        %1048 = vmatprep.subr.mxu0 0.0
        %1049 = vmatpush1.msra.mxu0 0.0
        %1050 = vmatprep.subr.mxu0 0.0
        %1051 = vmatpush1.msra.mxu0 0.0
        %1052 = vmatprep.subr.mxu0 0.0
        %1053 = vmatpush1.msra.mxu0 0.0
        %1054 = vmatprep.subr.mxu0 0.0
        %1055 = vmatpush1.msra.mxu0 0.0
        %1056 = vmatprep.subr.mxu0 0.0
        %1057 = vmatpush1.msra.mxu0 0.0
        %1058 = vmatprep.mubr.f32.mxu0 0.0
        %1059 = vmatmul.mubr.f32.gmra.mrb[0].mxu0 %v980
        %v1060 = vpop.f32.mrb[0].mxu0
        %v1061 = vadd.f32 0.0, %v1060
        %v1062 = vpop.f32.mrb[0].mxu0
        %1063 = vmatprep.mubr.f32.mxu0 0.0
        %1064 = vmatmul.mubr.f32.gmra.mrb[0].mxu0 %v983
        %v1065 = vpop.f32.mrb[0].mxu0
        %v1066 = vadd.f32 0.0, %v1065
        %v1067 = vpop.f32.mrb[0].mxu0
        %1068 = vmatprep.mubr.f32.mxu0 0.0
        %1069 = vmatmul.mubr.f32.gmra.mrb[0].mxu0 %v986
        %v1070 = vpop.f32.mrb[0].mxu0
        %v1071 = vadd.f32 0.0, %v1070
        %v1072 = vpop.f32.mrb[0].mxu0
        %1073 = vmatprep.mubr.f32.mxu0 0.0
        %1074 = vmatmul.mubr.f32.gmra.mrb[0].mxu0 %v989
        %v1075 = vpop.f32.mrb[0].mxu0
        %v1076 = vadd.f32 0.0, %v1075
        %v1077 = vpop.f32.mrb[0].mxu0
        %1078 = vmatprep.mubr.f32.mxu0 0.0
        %1079 = vmatmul.mubr.f32.gmra.mrb[0].mxu0 %v992
        %v1080 = vpop.f32.mrb[0].mxu0
        %v1081 = vadd.f32 0.0, %v1080
        %v1082 = vpop.f32.mrb[0].mxu0
        %1083 = vdwg.mxu0
        %v1084 = vsel %vm446, %v1061, -1.0
        %v1085 = vsel %vm447, %v1066, -1.0
        %v1086 = vsel %vm448, %v1071, -1.0
        %v1087 = vsel %vm449, %v1076, -1.0
        %v1088 = vsel %vm450, %v1081, -1.0
        %s1089 = scalar_lea.vmem %s194, 120
        %1090 = vst.msk [vmem:[%s1089] sm:$0xff] %vm456, %v1084
        %1091 = vst.msk [vmem:[%s1089 + $0x8] sm:$0xff] %vm456, %v1085
        %1092 = vst.msk [vmem:[%s1089 + $0x10] sm:$0xff] %vm456, %v1086
        %1093 = vst.msk [vmem:[%s1089 + $0x18] sm:$0xff] %vm456, %v1087
        %1094 = vst.msk [vmem:[%s1089 + $0x20] sm:$0xff] %vm456, %v1088
        %s1095 = smul.u32 4, %s17
        %p1096 = scmp.lt.s32.totalorder %s1095, 7
        %s1097 = scalar_select %p1096, %s1095, 7
        %s1098 = smul.addr %s1097, 5
        %s1099 = smul.addr %s1098, 8
        %s1100 = scalar_lea.vmem %s3, %s1099
        // Predicated region
        $region37: #{tpu_custom_call.1} parent=31 // pred_check
          %p1101 = pneg %p103
        $region38: #{tpu_custom_call.1} parent=31 // pred_check_branch
          %1103 = sbr.rel (%p1101) target = $region40
        $region39: #{tpu_custom_call.1} parent=31 // pred_region
          %s1104 = smul.u32 4, %s17
        $region40: #{tpu_custom_call.1} parent=31 // pred_fallthru
          _
      $region32: #{tpu_custom_call.1} parent=5 // pred_fallthru
        _
      %p1105 = scmp.le.s32.totalorder 2, %s12
      // Predicated region
      $region41: #{tpu_custom_call.1} parent=5 // pred_check
        %p1106 = pneg %p1105
      $region42: #{tpu_custom_call.1} parent=5 // pred_check_branch
        %1108 = sbr.rel (%p1106) target = $region44
      $region43: #{tpu_custom_call.1} parent=5 // pred_region
        %s1109 = ssub.s32 %s12, 2
        // Predicated region
        $region45: #{tpu_custom_call.1} parent=43 // pred_check
          %p1110 = pneg %p109
        $region46: #{tpu_custom_call.1} parent=43 // pred_check_branch
          %1112 = sbr.rel (%p1110) target = $region48
        $region47: #{tpu_custom_call.1} parent=43 // pred_region
          %s1113 = smul.u32 4, %s18
          %p1114 = scmp.lt.s32.totalorder %s1113, 7
          %s1115 = scalar_select %p1114, %s1113, 7
          %s1116 = smul.addr %s1115, 5
          %s1117 = smul.addr %s1116, 8
          %s1118 = scalar_lea.vmem %s3, %s1117
        $region48: #{tpu_custom_call.1} parent=43 // pred_fallthru
          _
      $region44: #{tpu_custom_call.1} parent=5 // pred_fallthru
        _
    $region6: #{tpu_custom_call.1} parent=1 // loop_footer
      %s16 = sadd.s32 1, %s12
    $region7: #{tpu_custom_call.1} parent=1 // loop_footer_branch
      %11 = sbr.rel target = $region3
    $region8: #{tpu_custom_call.1} parent=1 // loop_exit
      _
    %1119 = vsyncpa [#allocation3], 1
    %s1120 = scalar_lea.sflag [#allocation3], 1
    %1121 = vsyncpa %s1120, 1

// kernel: tpu_custom_call.1
$region0: #{tpu_custom_call.1}
  #allocation0 [shape = 'u32[]', space=smem, size = 0x4, offset = 0x4, fixed_abs, tag = 'smem constant byte address 0x4 - core index']
  #allocation1 [shape = 'u32[144,128]{1,0:T(1,128)}', space=vmem, size = 0x12000, scoped, tag = 'internal scratch']
  %s0 = inlined_call_operand.hbm [shape: f32[8,16,16], index: 0, kind: input, shape index: {}]
  %s1 = inlined_call_operand.vmem [shape: f32[40,16], index: 1, kind: input, shape index: {}]
  %s2 = inlined_call_operand.vmem [shape: f32[16,128], index: 2, kind: input, shape index: {}]
  %s3 = inlined_call_operand.vmem [shape: f32[8,40,24], index: 3, kind: output, shape index: {}]
  %s4 = sld [smem:[#allocation0]]
  $region49: #{tpu_custom_call.1} parent=0
    _
  %s6 = ssub.s32 1, %s4
  %s7 = scalar_select 0, %s6, %s4
  $region1: #{tpu_custom_call.1} parent=0
    #allocation2 [shape = 'u8[65536]{0}', space=vmem, size = 0x10000, scoped, tag = 'input window, operand 0']
    #allocation3 [shape = 's32[2]{0}', space=sflag, size = 0x8, scoped, tag = 'scoped memory for tpu_custom_call.1']
    %8 = vsyncpa [#allocation3], 0
    %s9 = scalar_lea.sflag [#allocation3], 1
    %10 = vsyncpa %s9, 0
    loop: start=0, step=1, limit=4
    $region2: #{tpu_custom_call.1} parent=1 // loop_pre_header
      _
    $region3: #{tpu_custom_call.1} parent=1 // loop_header
      %s12 = sphi 0, %s16
      %p13 = scmp.ge.s32.totalorder %s12, 4
      %s22 = sphi 0, %s24
      %s25 = sphi 0, %s22
      %s26 = sphi 0, %s25
      %s42 = sphi 0, %s26
      %s46 = sphi 0, %s46
      %s48 = sphi 0, %s46
      %s49 = sphi 0, %s48
      %s63 = sphi 0, %s49
      %s67 = sphi 0, %s67
      %s69 = sphi 0, %s67
      %s70 = sphi 0, %s69
      %s84 = sphi 0, %s70
      %s90 = sphi 0, %s92
      %s93 = sphi 0, %s90
      %s94 = sphi 0, %s93
      %s110 = sphi 0, %s94
    $region4: #{tpu_custom_call.1} parent=1 // loop_header_branch
      %15 = sbr.rel (%p13) target = $region8
    $region5: #{tpu_custom_call.1} parent=1 // loop_body
      %s17 = ssub.s32 %s12, 1
      %s18 = ssub.s32 %s12, 2
      %s19 = sadd.s32 %s12, 1
      %s20 = ssub.s32 %s12, %s19
      %p21 = scmp.eq.s32.totalorder %s20, 0
      %s23 = sadd.s32 %s22, 1
      %s24 = scalar_select %p21, %s22, %s23
      %p27 = pneg %p21
      %p28 = scmp.eq.s32.totalorder %s12, 1
      %p29 = por %p27, %p28
      %p30 = scmp.ne.s32.totalorder %s22, %s25
      %p31 = scmp.eq.s32.totalorder %s12, 0
      %p32 = por %p30, %p31
      %p33 = scmp.ne.s32.totalorder %s22, %s25
      %p34 = scmp.eq.s32.totalorder %s17, 1
      %p35 = por %p33, %p34
      %p36 = scmp.ne.s32.totalorder %s25, %s26
      %p37 = scmp.eq.s32.totalorder %s17, 0
      %p38 = por %p36, %p37
      %p39 = scmp.ne.s32.totalorder %s25, %s26
      %p40 = scmp.eq.s32.totalorder %s18, 1
      %p41 = por %p39, %p40
      %p43 = scmp.ne.s32.totalorder %s26, %s42
      %p44 = scmp.eq.s32.totalorder %s18, 0
      %p45 = por %p43, %p44
      %s47 = sadd.s32 %s46, 1
      %p50 = scmp.eq.s32.totalorder %s12, 1
      %p51 = scmp.ne.s32.totalorder %s46, %s48
      %p52 = scmp.eq.s32.totalorder %s12, 0
      %p53 = por %p51, %p52
      %p54 = scmp.ne.s32.totalorder %s46, %s48
      %p55 = scmp.eq.s32.totalorder %s17, 1
      %p56 = por %p54, %p55
      %p57 = scmp.ne.s32.totalorder %s48, %s49
      %p58 = scmp.eq.s32.totalorder %s17, 0
      %p59 = por %p57, %p58
      %p60 = scmp.ne.s32.totalorder %s48, %s49
      %p61 = scmp.eq.s32.totalorder %s18, 1
      %p62 = por %p60, %p61
      %p64 = scmp.ne.s32.totalorder %s49, %s63
      %p65 = scmp.eq.s32.totalorder %s18, 0
      %p66 = por %p64, %p65
      %s68 = sadd.s32 %s67, 1
      %p71 = scmp.eq.s32.totalorder %s12, 1
      %p72 = scmp.ne.s32.totalorder %s67, %s69
      %p73 = scmp.eq.s32.totalorder %s12, 0
      %p74 = por %p72, %p73
      %p75 = scmp.ne.s32.totalorder %s67, %s69
      %p76 = scmp.eq.s32.totalorder %s17, 1
      %p77 = por %p75, %p76
      %p78 = scmp.ne.s32.totalorder %s69, %s70
      %p79 = scmp.eq.s32.totalorder %s17, 0
      %p80 = por %p78, %p79
      %p81 = scmp.ne.s32.totalorder %s69, %s70
      %p82 = scmp.eq.s32.totalorder %s18, 1
      %p83 = por %p81, %p82
      %p85 = scmp.ne.s32.totalorder %s70, %s84
      %p86 = scmp.eq.s32.totalorder %s18, 0
      %p87 = por %p85, %p86
      %s88 = ssub.s32 %s12, %s19
      %p89 = scmp.eq.s32.totalorder %s88, 0
      %s91 = sadd.s32 %s90, 1
      %s92 = scalar_select %p89, %s90, %s91
      %p95 = pneg %p89
      %p96 = scmp.eq.s32.totalorder %s12, 1
      %p97 = por %p95, %p96
      %p98 = scmp.ne.s32.totalorder %s90, %s93
      %p99 = scmp.eq.s32.totalorder %s12, 0
      %p100 = por %p98, %p99
      %p101 = scmp.ne.s32.totalorder %s90, %s93
      %p102 = scmp.eq.s32.totalorder %s17, 1
      %p103 = por %p101, %p102
      %p104 = scmp.ne.s32.totalorder %s93, %s94
      %p105 = scmp.eq.s32.totalorder %s17, 0
      %p106 = por %p104, %p105
      %p107 = scmp.ne.s32.totalorder %s93, %s94
      %p108 = scmp.eq.s32.totalorder %s18, 1
      %p109 = por %p107, %p108
      %p111 = scmp.ne.s32.totalorder %s94, %s110
      %p112 = scmp.eq.s32.totalorder %s18, 0
      %p113 = por %p111, %p112
      %p114 = scmp.le.s32.totalorder 1, %s12
      %p115 = scmp.lt.s32.totalorder %s12, 3
      %p116 = pnand %p114, %p115
      %p117 = pneg %p116
      // Predicated region
      $region9: #{tpu_custom_call.1} parent=5 // pred_check
        _
      $region10: #{tpu_custom_call.1} parent=5 // pred_check_branch
        %119 = sbr.rel (%p116) target = $region12
      $region11: #{tpu_custom_call.1} parent=5 // pred_region
        %s120 = ssub.s32 %s12, 1
        // Predicated region
        $region13: #{tpu_custom_call.1} parent=11 // pred_check
          %p121 = pneg %p59
        $region14: #{tpu_custom_call.1} parent=11 // pred_check_branch
          %123 = sbr.rel (%p121) target = $region16
        $region15: #{tpu_custom_call.1} parent=11 // pred_region
          _
        $region16: #{tpu_custom_call.1} parent=11 // pred_fallthru
          _
        // Predicated region
        $region17: #{tpu_custom_call.1} parent=11 // pred_check
          %p124 = pneg %p80
        $region18: #{tpu_custom_call.1} parent=11 // pred_check_branch
          %126 = sbr.rel (%p124) target = $region20
        $region19: #{tpu_custom_call.1} parent=11 // pred_region
          _
        $region20: #{tpu_custom_call.1} parent=11 // pred_fallthru
          _
      $region12: #{tpu_custom_call.1} parent=5 // pred_fallthru
        _
      %p127 = scmp.lt.s32.totalorder %s12, 2
      // Predicated region
      $region21: #{tpu_custom_call.1} parent=5 // pred_check
        %p128 = pneg %p127
      $region22: #{tpu_custom_call.1} parent=5 // pred_check_branch
        %130 = sbr.rel (%p128) target = $region24
      $region23: #{tpu_custom_call.1} parent=5 // pred_region
        // Predicated region
        $region25: #{tpu_custom_call.1} parent=23 // pred_check
          %p131 = pneg %p32
        $region26: #{tpu_custom_call.1} parent=23 // pred_check_branch
          %133 = sbr.rel (%p131) target = $region28
        $region27: #{tpu_custom_call.1} parent=23 // pred_region
          %s134 = sand.u32 %s22, 1
          %s135 = scalar_lea.sflag [#allocation3], %s134
          %s136 = sand.u32 %s22, 1
          %s137 = smul.addr %s136, 64
          %s138 = scalar_lea.vmem [#allocation2], %s137
          %s139 = smul.u32 4, %s12
          %s141 = ssub.s32 1024, 1024
          %142 = vsyncadd %s135, %s141
          %s143 = smul.addr %s139, 2
          %s144 = smul.addr %s143, 128
          %s145 = scalar_lea.hbm %s0, %s144
          %s146 = sshll.u32 %s138, 4
          %s147 = int_to_ptr.vmem [resolvable:$true] %s146
          %152 = dma.hbm_to_vmem [thread:$0]  %s145, 1024, %s147, %s135, 128, 128, 8
        $region28: #{tpu_custom_call.1} parent=23 // pred_fallthru
          _
      $region24: #{tpu_custom_call.1} parent=5 // pred_fallthru
        _
      %p153 = scmp.le.s32.totalorder 1, %s12
      %p154 = scmp.lt.s32.totalorder %s12, 3
      %p155 = pnand %p153, %p154
      %p156 = pneg %p155
      // Predicated region
      $region29: #{tpu_custom_call.1} parent=5 // pred_check
        _
      $region30: #{tpu_custom_call.1} parent=5 // pred_check_branch
        %158 = sbr.rel (%p155) target = $region32
      $region31: #{tpu_custom_call.1} parent=5 // pred_region
        %s159 = ssub.s32 %s12, 1
        %s160 = sand.u32 %s25, 1
        %s161 = scalar_lea.sflag [#allocation3], %s160
        %s162 = sand.u32 %s25, 1
        %s163 = smul.addr %s162, 64
        %s164 = scalar_lea.vmem [#allocation2], %s163
        // Predicated region
        $region33: #{tpu_custom_call.1} parent=31 // pred_check
          %p165 = pneg %p38
        $region34: #{tpu_custom_call.1} parent=31 // pred_check_branch
          %167 = sbr.rel (%p165) target = $region36
        $region35: #{tpu_custom_call.1} parent=31 // pred_region
          %168 = dma.done %s161, 1024
        $region36: #{tpu_custom_call.1} parent=31 // pred_fallthru
          _
        %s169 = sand.u32 %s25, 1
        %s170 = scalar_lea.sflag [#allocation3], %s169
        %s171 = sand.u32 %s25, 1
        %s172 = smul.addr %s171, 64
        %s173 = scalar_lea.vmem [#allocation2], %s172
        %p174 = pneg %p38
        %p175 = pneg %p35
        %p176 = pneg %p59
        %p177 = pneg %p56
        %p178 = pneg %p80
        %p179 = pneg %p77
        %p180 = pneg %p106
        %p181 = pneg %p103
        %s182 = smul.u32 4, %s17
        %p183 = scmp.lt.s32.totalorder %s182, 7
        %s184 = scalar_select %p183, %s182, 7
        %s185 = smul.addr %s184, 5
        %s186 = smul.addr %s185, 8
        %s187 = scalar_lea.vmem %s3, %s186
        %s188 = smul.u32 4, %s17
        %s189 = smul.u32 4, %s17
        %p190 = scmp.lt.s32.totalorder %s189, 7
        %s191 = scalar_select %p190, %s189, 7
        %s192 = smul.addr %s191, 5
        %s193 = smul.addr %s192, 8
        %s194 = scalar_lea.vmem %s3, %s193
        %s195 = smul.u32 4, %s17
        %v196 = vld [vmem:[%s1] sm:$0xff]
        %v197 = vld [vmem:[%s1 + $0x8] sm:$0xff]
        %v198 = vld [vmem:[%s1 + $0x10] sm:$0xff]
        %v199 = vld [vmem:[%s1 + $0x18] sm:$0xff]
        %v200 = vld [vmem:[%s1 + $0x20] sm:$0xff]
        %v201 = vld [vmem:[%s164] sm:$0xff]
        %v202 = vld [vmem:[%s164 + $0x8] sm:$0xff]
        %vm203 = vcmask 130048
        %v205 = vsel %vm203, %v196, 0
        %v208 = vsel %vm203, %v197, 0
        %v211 = vsel %vm203, %v198, 0
        %v214 = vsel %vm203, %v199, 0
        %v217 = vsel %vm203, %v200, 0
        %219 = vmatprep.subr.mxu0 0.0
        %220 = vmatpush1.msra.mxu0 %v201
        %221 = vmatprep.subr.mxu0 0.0
        %222 = vmatpush1.msra.mxu0 %v202
        %223 = vmatprep.subr.mxu0 0.0
        %224 = vmatpush1.msra.mxu0 0.0
        %225 = vmatprep.subr.mxu0 0.0
        %226 = vmatpush1.msra.mxu0 0.0
        %227 = vmatprep.subr.mxu0 0.0
        %228 = vmatpush1.msra.mxu0 0.0
        %229 = vmatprep.subr.mxu0 0.0
        %230 = vmatpush1.msra.mxu0 0.0
        %231 = vmatprep.subr.mxu0 0.0
        %232 = vmatpush1.msra.mxu0 0.0
        %233 = vmatprep.subr.mxu0 0.0
        %234 = vmatpush1.msra.mxu0 0.0
        %235 = vmatprep.subr.mxu0 0.0
        %236 = vmatpush1.msra.mxu0 0.0
        %237 = vmatprep.subr.mxu0 0.0
        %238 = vmatpush1.msra.mxu0 0.0
        %239 = vmatprep.subr.mxu0 0.0
        %240 = vmatpush1.msra.mxu0 0.0
        %241 = vmatprep.subr.mxu0 0.0
        %242 = vmatpush1.msra.mxu0 0.0
        %243 = vmatprep.subr.mxu0 0.0
        %244 = vmatpush1.msra.mxu0 0.0
        %245 = vmatprep.subr.mxu0 0.0
        %246 = vmatpush1.msra.mxu0 0.0
        %247 = vmatprep.subr.mxu0 0.0
        %248 = vmatpush1.msra.mxu0 0.0
        %249 = vmatprep.subr.mxu0 0.0
        %250 = vmatpush1.msra.mxu0 0.0
        %251 = vmatprep.subr.mxu0 0.0
        %252 = vmatpush1.msra.mxu0 0.0
        %253 = vmatprep.subr.mxu0 0.0
        %254 = vmatpush1.msra.mxu0 0.0
        %255 = vmatprep.subr.mxu0 0.0
        %256 = vmatpush1.msra.mxu0 0.0
        %257 = vmatprep.subr.mxu0 0.0
        %258 = vmatpush1.msra.mxu0 0.0
        %259 = vmatprep.subr.mxu0 0.0
        %260 = vmatpush1.msra.mxu0 0.0
        %261 = vmatprep.subr.mxu0 0.0
        %262 = vmatpush1.msra.mxu0 0.0
        %263 = vmatprep.subr.mxu0 0.0
        %264 = vmatpush1.msra.mxu0 0.0
        %265 = vmatprep.subr.mxu0 0.0
        %266 = vmatpush1.msra.mxu0 0.0
        %267 = vmatprep.subr.mxu0 0.0
        %268 = vmatpush1.msra.mxu0 0.0
        %269 = vmatprep.subr.mxu0 0.0
        %270 = vmatpush1.msra.mxu0 0.0
        %271 = vmatprep.subr.mxu0 0.0
        %272 = vmatpush1.msra.mxu0 0.0
        %273 = vmatprep.subr.mxu0 0.0
        %274 = vmatpush1.msra.mxu0 0.0
        %275 = vmatprep.subr.mxu0 0.0
        %276 = vmatpush1.msra.mxu0 0.0
        %277 = vmatprep.subr.mxu0 0.0
        %278 = vmatpush1.msra.mxu0 0.0
        %279 = vmatprep.subr.mxu0 0.0
        %280 = vmatpush1.msra.mxu0 0.0
        %281 = vmatprep.subr.mxu0 0.0
        %282 = vmatpush1.msra.mxu0 0.0
        %283 = vmatprep.mubr.f32.mxu0 0.0
        %284 = vmatmul.mubr.f32.gmra.mrb[0].mxu0 %v205
        %v285 = vpop.f32.mrb[0].mxu0
        %v286 = vadd.f32 0.0, %v285
        %v287 = vpop.f32.mrb[0].mxu0
        %288 = vmatprep.mubr.f32.mxu0 0.0
        %289 = vmatmul.mubr.f32.gmra.mrb[0].mxu0 %v208
        %v290 = vpop.f32.mrb[0].mxu0
        %v291 = vadd.f32 0.0, %v290
        %v292 = vpop.f32.mrb[0].mxu0
        %293 = vmatprep.mubr.f32.mxu0 0.0
        %294 = vmatmul.mubr.f32.gmra.mrb[0].mxu0 %v211
        %v295 = vpop.f32.mrb[0].mxu0
        %v296 = vadd.f32 0.0, %v295
        %v297 = vpop.f32.mrb[0].mxu0
        %298 = vmatprep.mubr.f32.mxu0 0.0
        %299 = vmatmul.mubr.f32.gmra.mrb[0].mxu0 %v214
        %v300 = vpop.f32.mrb[0].mxu0
        %v301 = vadd.f32 0.0, %v300
        %v302 = vpop.f32.mrb[0].mxu0
        %303 = vmatprep.mubr.f32.mxu0 0.0
        %304 = vmatmul.mubr.f32.gmra.mrb[0].mxu0 %v217
        %v305 = vpop.f32.mrb[0].mxu0
        %v306 = vadd.f32 0.0, %v305
        %v307 = vpop.f32.mrb[0].mxu0
        %308 = vdwg.mxu0
        %v309 = vld [vmem:[%s2] sm:$0xff]
        %v310 = vld [vmem:[%s2 + $0x8] sm:$0xff]
        %v312 = vsel %vm203, %v286, 0
        %v315 = vsel %vm203, %v291, 0
        %v318 = vsel %vm203, %v296, 0
        %v321 = vsel %vm203, %v301, 0
        %v324 = vsel %vm203, %v306, 0
        %326 = vmatprep.subr.mxu0 0.0
        %327 = vmatpush1.msra.mxu0 %v309
        %328 = vmatprep.subr.mxu0 0.0
        %329 = vmatpush1.msra.mxu0 %v310
        %330 = vmatprep.subr.mxu0 0.0
        %331 = vmatpush1.msra.mxu0 0.0
        %332 = vmatprep.subr.mxu0 0.0
        %333 = vmatpush1.msra.mxu0 0.0
        %334 = vmatprep.subr.mxu0 0.0
        %335 = vmatpush1.msra.mxu0 0.0
        %336 = vmatprep.subr.mxu0 0.0
        %337 = vmatpush1.msra.mxu0 0.0
        %338 = vmatprep.subr.mxu0 0.0
        %339 = vmatpush1.msra.mxu0 0.0
        %340 = vmatprep.subr.mxu0 0.0
        %341 = vmatpush1.msra.mxu0 0.0
        %342 = vmatprep.subr.mxu0 0.0
        %343 = vmatpush1.msra.mxu0 0.0
        %344 = vmatprep.subr.mxu0 0.0
        %345 = vmatpush1.msra.mxu0 0.0
        %346 = vmatprep.subr.mxu0 0.0
        %347 = vmatpush1.msra.mxu0 0.0
        %348 = vmatprep.subr.mxu0 0.0
        %349 = vmatpush1.msra.mxu0 0.0
        %350 = vmatprep.subr.mxu0 0.0
        %351 = vmatpush1.msra.mxu0 0.0
        %352 = vmatprep.subr.mxu0 0.0
        %353 = vmatpush1.msra.mxu0 0.0
        %354 = vmatprep.subr.mxu0 0.0
        %355 = vmatpush1.msra.mxu0 0.0
        %356 = vmatprep.subr.mxu0 0.0
        %357 = vmatpush1.msra.mxu0 0.0
        %358 = vmatprep.subr.mxu0 0.0
        %359 = vmatpush1.msra.mxu0 0.0
        %360 = vmatprep.subr.mxu0 0.0
        %361 = vmatpush1.msra.mxu0 0.0
        %362 = vmatprep.subr.mxu0 0.0
        %363 = vmatpush1.msra.mxu0 0.0
        %364 = vmatprep.subr.mxu0 0.0
        %365 = vmatpush1.msra.mxu0 0.0
        %366 = vmatprep.subr.mxu0 0.0
        %367 = vmatpush1.msra.mxu0 0.0
        %368 = vmatprep.subr.mxu0 0.0
        %369 = vmatpush1.msra.mxu0 0.0
        %370 = vmatprep.subr.mxu0 0.0
        %371 = vmatpush1.msra.mxu0 0.0
        %372 = vmatprep.subr.mxu0 0.0
        %373 = vmatpush1.msra.mxu0 0.0
        %374 = vmatprep.subr.mxu0 0.0
        %375 = vmatpush1.msra.mxu0 0.0
        %376 = vmatprep.subr.mxu0 0.0
        %377 = vmatpush1.msra.mxu0 0.0
        %378 = vmatprep.subr.mxu0 0.0
        %379 = vmatpush1.msra.mxu0 0.0
        %380 = vmatprep.subr.mxu0 0.0
        %381 = vmatpush1.msra.mxu0 0.0
        %382 = vmatprep.subr.mxu0 0.0
        %383 = vmatpush1.msra.mxu0 0.0
        %384 = vmatprep.subr.mxu0 0.0
        %385 = vmatpush1.msra.mxu0 0.0
        %386 = vmatprep.subr.mxu0 0.0
        %387 = vmatpush1.msra.mxu0 0.0
        %388 = vmatprep.subr.mxu0 0.0
        %389 = vmatpush1.msra.mxu0 0.0
        %390 = vmatprep.mubr.f32.mxu0 0.0
        %391 = vmatmul.mubr.f32.gmra.mrb[0].mxu0 %v312
        %v392 = vpop.f32.mrb[0].mxu0
        %v393 = vadd.f32 0.0, %v392
        %v394 = vpop.f32.mrb[0].mxu0
        %395 = vmatprep.mubr.f32.mxu0 0.0
        %396 = vmatmul.mubr.f32.gmra.mrb[0].mxu0 %v315
        %v397 = vpop.f32.mrb[0].mxu0
        %v398 = vadd.f32 0.0, %v397
        %v399 = vpop.f32.mrb[0].mxu0
        %400 = vmatprep.mubr.f32.mxu0 0.0
        %401 = vmatmul.mubr.f32.gmra.mrb[0].mxu0 %v318
        %v402 = vpop.f32.mrb[0].mxu0
        %v403 = vadd.f32 0.0, %v402
        %v404 = vpop.f32.mrb[0].mxu0
        %405 = vmatprep.mubr.f32.mxu0 0.0
        %406 = vmatmul.mubr.f32.gmra.mrb[0].mxu0 %v321
        %v407 = vpop.f32.mrb[0].mxu0
        %v408 = vadd.f32 0.0, %v407
        %v409 = vpop.f32.mrb[0].mxu0
        %410 = vmatprep.mubr.f32.mxu0 0.0
        %411 = vmatmul.mubr.f32.gmra.mrb[0].mxu0 %v324
        %v412 = vpop.f32.mrb[0].mxu0
        %v413 = vadd.f32 0.0, %v412
        %v414 = vpop.f32.mrb[0].mxu0
        %415 = vdwg.mxu0
        %v416 = vlaneseq
        %v417 = vshrl.u32 %v416, 7
        %v418 = vadd.s32 %v417, 8
        %v419 = vadd.s32 %v417, 16
        %v420 = vadd.s32 %v417, 24
        %v421 = vadd.s32 %v417, 32
        %v422 = vlaneseq
        %v423 = vand.u32 %v422, 127
        %vm424 = vcmp.ge.s32.totalorder %v417, 0
        %vm425 = vcmp.ge.s32.totalorder %v418, 0
        %vm426 = vcmp.ge.s32.totalorder %v419, 0
        %vm427 = vcmp.ge.s32.totalorder %v420, 0
        %vm428 = vcmp.ge.s32.totalorder %v421, 0
        %vm429 = vcmp.lt.s32.totalorder %v417, 32
        %vm430 = vcmp.lt.s32.totalorder %v418, 32
        %vm431 = vcmp.lt.s32.totalorder %v419, 32
        %vm432 = vcmp.lt.s32.totalorder %v420, 32
        %vm433 = vcmp.lt.s32.totalorder %v421, 32
        %vm434 = vmand %vm424, %vm429
        %vm435 = vmand %vm425, %vm430
        %vm436 = vmand %vm426, %vm431
        %vm437 = vmand %vm427, %vm432
        %vm438 = vmand %vm428, %vm433
        %vm439 = vcmp.ge.s32.totalorder %v423, 0
        %vm440 = vmand %vm434, %vm439
        %vm441 = vmand %vm435, %vm439
        %vm442 = vmand %vm436, %vm439
        %vm443 = vmand %vm437, %vm439
        %vm444 = vmand %vm438, %vm439
        %vm445 = vcmp.lt.s32.totalorder %v423, 24
        %vm446 = vmand %vm440, %vm445
        %vm447 = vmand %vm441, %vm445
        %vm448 = vmand %vm442, %vm445
        %vm449 = vmand %vm443, %vm445
        %vm450 = vmand %vm444, %vm445
        %v451 = vsel %vm446, %v393, -1.0
        %v452 = vsel %vm447, %v398, -1.0
        %v453 = vsel %vm448, %v403, -1.0
        %v454 = vsel %vm449, %v408, -1.0
        %v455 = vsel %vm450, %v413, -1.0
        %vm456 = vcmask 195584
        %457 = vst.msk [vmem:[%s194] sm:$0xff] %vm456, %v451
        %458 = vst.msk [vmem:[%s194 + $0x8] sm:$0xff] %vm456, %v452
        %459 = vst.msk [vmem:[%s194 + $0x10] sm:$0xff] %vm456, %v453
        %460 = vst.msk [vmem:[%s194 + $0x18] sm:$0xff] %vm456, %v454
        %461 = vst.msk [vmem:[%s194 + $0x20] sm:$0xff] %vm456, %v455
        %s462 = scalar_lea.vmem %s164, 16 [#allocation2]
        %v463 = vld [vmem:[%s462] sm:$0xff]
        %v464 = vld [vmem:[%s462 + $0x8] sm:$0xff]
        %465 = vmatprep.subr.mxu0 0.0
        %466 = vmatpush1.msra.mxu0 %v463
        %467 = vmatprep.subr.mxu0 0.0
        %468 = vmatpush1.msra.mxu0 %v464
        %469 = vmatprep.subr.mxu0 0.0
        %470 = vmatpush1.msra.mxu0 0.0
        %471 = vmatprep.subr.mxu0 0.0
        %472 = vmatpush1.msra.mxu0 0.0
        %473 = vmatprep.subr.mxu0 0.0
        %474 = vmatpush1.msra.mxu0 0.0
        %475 = vmatprep.subr.mxu0 0.0
        %476 = vmatpush1.msra.mxu0 0.0
        %477 = vmatprep.subr.mxu0 0.0
        %478 = vmatpush1.msra.mxu0 0.0
        %479 = vmatprep.subr.mxu0 0.0
        %480 = vmatpush1.msra.mxu0 0.0
        %481 = vmatprep.subr.mxu0 0.0
        %482 = vmatpush1.msra.mxu0 0.0
        %483 = vmatprep.subr.mxu0 0.0
        %484 = vmatpush1.msra.mxu0 0.0
        %485 = vmatprep.subr.mxu0 0.0
        %486 = vmatpush1.msra.mxu0 0.0
        %487 = vmatprep.subr.mxu0 0.0
        %488 = vmatpush1.msra.mxu0 0.0
        %489 = vmatprep.subr.mxu0 0.0
        %490 = vmatpush1.msra.mxu0 0.0
        %491 = vmatprep.subr.mxu0 0.0
        %492 = vmatpush1.msra.mxu0 0.0
        %493 = vmatprep.subr.mxu0 0.0
        %494 = vmatpush1.msra.mxu0 0.0
        %495 = vmatprep.subr.mxu0 0.0
        %496 = vmatpush1.msra.mxu0 0.0
        %497 = vmatprep.subr.mxu0 0.0
        %498 = vmatpush1.msra.mxu0 0.0
        %499 = vmatprep.subr.mxu0 0.0
        %500 = vmatpush1.msra.mxu0 0.0
        %501 = vmatprep.subr.mxu0 0.0
        %502 = vmatpush1.msra.mxu0 0.0
        %503 = vmatprep.subr.mxu0 0.0
        %504 = vmatpush1.msra.mxu0 0.0
        %505 = vmatprep.subr.mxu0 0.0
        %506 = vmatpush1.msra.mxu0 0.0
        %507 = vmatprep.subr.mxu0 0.0
        %508 = vmatpush1.msra.mxu0 0.0
        %509 = vmatprep.subr.mxu0 0.0
        %510 = vmatpush1.msra.mxu0 0.0
        %511 = vmatprep.subr.mxu0 0.0
        %512 = vmatpush1.msra.mxu0 0.0
        %513 = vmatprep.subr.mxu0 0.0
        %514 = vmatpush1.msra.mxu0 0.0
        %515 = vmatprep.subr.mxu0 0.0
        %516 = vmatpush1.msra.mxu0 0.0
        %517 = vmatprep.subr.mxu0 0.0
        %518 = vmatpush1.msra.mxu0 0.0
        %519 = vmatprep.subr.mxu0 0.0
        %520 = vmatpush1.msra.mxu0 0.0
        %521 = vmatprep.subr.mxu0 0.0
        %522 = vmatpush1.msra.mxu0 0.0
        %523 = vmatprep.subr.mxu0 0.0
        %524 = vmatpush1.msra.mxu0 0.0
        %525 = vmatprep.subr.mxu0 0.0
        %526 = vmatpush1.msra.mxu0 0.0
        %527 = vmatprep.subr.mxu0 0.0
        %528 = vmatpush1.msra.mxu0 0.0
        %529 = vmatprep.mubr.f32.mxu0 0.0
        %530 = vmatmul.mubr.f32.gmra.mrb[0].mxu0 %v205
        %v531 = vpop.f32.mrb[0].mxu0
        %v532 = vadd.f32 0.0, %v531
        %v533 = vpop.f32.mrb[0].mxu0
        %534 = vmatprep.mubr.f32.mxu0 0.0
        %535 = vmatmul.mubr.f32.gmra.mrb[0].mxu0 %v208
        %v536 = vpop.f32.mrb[0].mxu0
        %v537 = vadd.f32 0.0, %v536
        %v538 = vpop.f32.mrb[0].mxu0
        %539 = vmatprep.mubr.f32.mxu0 0.0
        %540 = vmatmul.mubr.f32.gmra.mrb[0].mxu0 %v211
        %v541 = vpop.f32.mrb[0].mxu0
        %v542 = vadd.f32 0.0, %v541
        %v543 = vpop.f32.mrb[0].mxu0
        %544 = vmatprep.mubr.f32.mxu0 0.0
        %545 = vmatmul.mubr.f32.gmra.mrb[0].mxu0 %v214
        %v546 = vpop.f32.mrb[0].mxu0
        %v547 = vadd.f32 0.0, %v546
        %v548 = vpop.f32.mrb[0].mxu0
        %549 = vmatprep.mubr.f32.mxu0 0.0
        %550 = vmatmul.mubr.f32.gmra.mrb[0].mxu0 %v217
        %v551 = vpop.f32.mrb[0].mxu0
        %v552 = vadd.f32 0.0, %v551
        %v553 = vpop.f32.mrb[0].mxu0
        %554 = vdwg.mxu0
        %v555 = vld [vmem:[%s2] sm:$0xff]
        %v556 = vld [vmem:[%s2 + $0x8] sm:$0xff]
        %v558 = vsel %vm203, %v532, 0
        %v561 = vsel %vm203, %v537, 0
        %v564 = vsel %vm203, %v542, 0
        %v567 = vsel %vm203, %v547, 0
        %v570 = vsel %vm203, %v552, 0
        %572 = vmatprep.subr.mxu0 0.0
        %573 = vmatpush1.msra.mxu0 %v555
        %574 = vmatprep.subr.mxu0 0.0
        %575 = vmatpush1.msra.mxu0 %v556
        %576 = vmatprep.subr.mxu0 0.0
        %577 = vmatpush1.msra.mxu0 0.0
        %578 = vmatprep.subr.mxu0 0.0
        %579 = vmatpush1.msra.mxu0 0.0
        %580 = vmatprep.subr.mxu0 0.0
        %581 = vmatpush1.msra.mxu0 0.0
        %582 = vmatprep.subr.mxu0 0.0
        %583 = vmatpush1.msra.mxu0 0.0
        %584 = vmatprep.subr.mxu0 0.0
        %585 = vmatpush1.msra.mxu0 0.0
        %586 = vmatprep.subr.mxu0 0.0
        %587 = vmatpush1.msra.mxu0 0.0
        %588 = vmatprep.subr.mxu0 0.0
        %589 = vmatpush1.msra.mxu0 0.0
        %590 = vmatprep.subr.mxu0 0.0
        %591 = vmatpush1.msra.mxu0 0.0
        %592 = vmatprep.subr.mxu0 0.0
        %593 = vmatpush1.msra.mxu0 0.0
        %594 = vmatprep.subr.mxu0 0.0
        %595 = vmatpush1.msra.mxu0 0.0
        %596 = vmatprep.subr.mxu0 0.0
        %597 = vmatpush1.msra.mxu0 0.0
        %598 = vmatprep.subr.mxu0 0.0
        %599 = vmatpush1.msra.mxu0 0.0
        %600 = vmatprep.subr.mxu0 0.0
        %601 = vmatpush1.msra.mxu0 0.0
        %602 = vmatprep.subr.mxu0 0.0
        %603 = vmatpush1.msra.mxu0 0.0
        %604 = vmatprep.subr.mxu0 0.0
        %605 = vmatpush1.msra.mxu0 0.0
        %606 = vmatprep.subr.mxu0 0.0
        %607 = vmatpush1.msra.mxu0 0.0
        %608 = vmatprep.subr.mxu0 0.0
        %609 = vmatpush1.msra.mxu0 0.0
        %610 = vmatprep.subr.mxu0 0.0
        %611 = vmatpush1.msra.mxu0 0.0
        %612 = vmatprep.subr.mxu0 0.0
        %613 = vmatpush1.msra.mxu0 0.0
        %614 = vmatprep.subr.mxu0 0.0
        %615 = vmatpush1.msra.mxu0 0.0
        %616 = vmatprep.subr.mxu0 0.0
        %617 = vmatpush1.msra.mxu0 0.0
        %618 = vmatprep.subr.mxu0 0.0
        %619 = vmatpush1.msra.mxu0 0.0
        %620 = vmatprep.subr.mxu0 0.0
        %621 = vmatpush1.msra.mxu0 0.0
        %622 = vmatprep.subr.mxu0 0.0
        %623 = vmatpush1.msra.mxu0 0.0
        %624 = vmatprep.subr.mxu0 0.0
        %625 = vmatpush1.msra.mxu0 0.0
        %626 = vmatprep.subr.mxu0 0.0
        %627 = vmatpush1.msra.mxu0 0.0
        %628 = vmatprep.subr.mxu0 0.0
        %629 = vmatpush1.msra.mxu0 0.0
        %630 = vmatprep.subr.mxu0 0.0
        %631 = vmatpush1.msra.mxu0 0.0
        %632 = vmatprep.subr.mxu0 0.0
        %633 = vmatpush1.msra.mxu0 0.0
        %634 = vmatprep.subr.mxu0 0.0
        %635 = vmatpush1.msra.mxu0 0.0
        %636 = vmatprep.mubr.f32.mxu0 0.0
        %637 = vmatmul.mubr.f32.gmra.mrb[0].mxu0 %v558
        %v638 = vpop.f32.mrb[0].mxu0
        %v639 = vadd.f32 0.0, %v638
        %v640 = vpop.f32.mrb[0].mxu0
        %641 = vmatprep.mubr.f32.mxu0 0.0
        %642 = vmatmul.mubr.f32.gmra.mrb[0].mxu0 %v561
        %v643 = vpop.f32.mrb[0].mxu0
        %v644 = vadd.f32 0.0, %v643
        %v645 = vpop.f32.mrb[0].mxu0
        %646 = vmatprep.mubr.f32.mxu0 0.0
        %647 = vmatmul.mubr.f32.gmra.mrb[0].mxu0 %v564
        %v648 = vpop.f32.mrb[0].mxu0
        %v649 = vadd.f32 0.0, %v648
        %v650 = vpop.f32.mrb[0].mxu0
        %651 = vmatprep.mubr.f32.mxu0 0.0
        %652 = vmatmul.mubr.f32.gmra.mrb[0].mxu0 %v567
        %v653 = vpop.f32.mrb[0].mxu0
        %v654 = vadd.f32 0.0, %v653
        %v655 = vpop.f32.mrb[0].mxu0
        %656 = vmatprep.mubr.f32.mxu0 0.0
        %657 = vmatmul.mubr.f32.gmra.mrb[0].mxu0 %v570
        %v658 = vpop.f32.mrb[0].mxu0
        %v659 = vadd.f32 0.0, %v658
        %v660 = vpop.f32.mrb[0].mxu0
        %661 = vdwg.mxu0
        %v662 = vsel %vm446, %v639, -1.0
        %v663 = vsel %vm447, %v644, -1.0
        %v664 = vsel %vm448, %v649, -1.0
        %v665 = vsel %vm449, %v654, -1.0
        %v666 = vsel %vm450, %v659, -1.0
        %s667 = scalar_lea.vmem %s194, 40
        %668 = vst.msk [vmem:[%s667] sm:$0xff] %vm456, %v662
        %669 = vst.msk [vmem:[%s667 + $0x8] sm:$0xff] %vm456, %v663
        %670 = vst.msk [vmem:[%s667 + $0x10] sm:$0xff] %vm456, %v664
        %671 = vst.msk [vmem:[%s667 + $0x18] sm:$0xff] %vm456, %v665
        %672 = vst.msk [vmem:[%s667 + $0x20] sm:$0xff] %vm456, %v666
        %s673 = scalar_lea.vmem %s164, 32 [#allocation2]
        %v674 = vld [vmem:[%s673] sm:$0xff]
        %v675 = vld [vmem:[%s673 + $0x8] sm:$0xff]
        %676 = vmatprep.subr.mxu0 0.0
        %677 = vmatpush1.msra.mxu0 %v674
        %678 = vmatprep.subr.mxu0 0.0
        %679 = vmatpush1.msra.mxu0 %v675
        %680 = vmatprep.subr.mxu0 0.0
        %681 = vmatpush1.msra.mxu0 0.0
        %682 = vmatprep.subr.mxu0 0.0
        %683 = vmatpush1.msra.mxu0 0.0
        %684 = vmatprep.subr.mxu0 0.0
        %685 = vmatpush1.msra.mxu0 0.0
        %686 = vmatprep.subr.mxu0 0.0
        %687 = vmatpush1.msra.mxu0 0.0
        %688 = vmatprep.subr.mxu0 0.0
        %689 = vmatpush1.msra.mxu0 0.0
        %690 = vmatprep.subr.mxu0 0.0
        %691 = vmatpush1.msra.mxu0 0.0
        %692 = vmatprep.subr.mxu0 0.0
        %693 = vmatpush1.msra.mxu0 0.0
        %694 = vmatprep.subr.mxu0 0.0
        %695 = vmatpush1.msra.mxu0 0.0
        %696 = vmatprep.subr.mxu0 0.0
        %697 = vmatpush1.msra.mxu0 0.0
        %698 = vmatprep.subr.mxu0 0.0
        %699 = vmatpush1.msra.mxu0 0.0
        %700 = vmatprep.subr.mxu0 0.0
        %701 = vmatpush1.msra.mxu0 0.0
        %702 = vmatprep.subr.mxu0 0.0
        %703 = vmatpush1.msra.mxu0 0.0
        %704 = vmatprep.subr.mxu0 0.0
        %705 = vmatpush1.msra.mxu0 0.0
        %706 = vmatprep.subr.mxu0 0.0
        %707 = vmatpush1.msra.mxu0 0.0
        %708 = vmatprep.subr.mxu0 0.0
        %709 = vmatpush1.msra.mxu0 0.0
        %710 = vmatprep.subr.mxu0 0.0
        %711 = vmatpush1.msra.mxu0 0.0
        %712 = vmatprep.subr.mxu0 0.0
        %713 = vmatpush1.msra.mxu0 0.0
        %714 = vmatprep.subr.mxu0 0.0
        %715 = vmatpush1.msra.mxu0 0.0
        %716 = vmatprep.subr.mxu0 0.0
        %717 = vmatpush1.msra.mxu0 0.0
        %718 = vmatprep.subr.mxu0 0.0
        %719 = vmatpush1.msra.mxu0 0.0
        %720 = vmatprep.subr.mxu0 0.0
        %721 = vmatpush1.msra.mxu0 0.0
        %722 = vmatprep.subr.mxu0 0.0
        %723 = vmatpush1.msra.mxu0 0.0
        %724 = vmatprep.subr.mxu0 0.0
        %725 = vmatpush1.msra.mxu0 0.0
        %726 = vmatprep.subr.mxu0 0.0
        %727 = vmatpush1.msra.mxu0 0.0
        %728 = vmatprep.subr.mxu0 0.0
        %729 = vmatpush1.msra.mxu0 0.0
        %730 = vmatprep.subr.mxu0 0.0
        %731 = vmatpush1.msra.mxu0 0.0
        %732 = vmatprep.subr.mxu0 0.0
        %733 = vmatpush1.msra.mxu0 0.0
        %734 = vmatprep.subr.mxu0 0.0
        %735 = vmatpush1.msra.mxu0 0.0
        %736 = vmatprep.subr.mxu0 0.0
        %737 = vmatpush1.msra.mxu0 0.0
        %738 = vmatprep.subr.mxu0 0.0
        %739 = vmatpush1.msra.mxu0 0.0
        %740 = vmatprep.mubr.f32.mxu0 0.0
        %741 = vmatmul.mubr.f32.gmra.mrb[0].mxu0 %v205
        %v742 = vpop.f32.mrb[0].mxu0
        %v743 = vadd.f32 0.0, %v742
        %v744 = vpop.f32.mrb[0].mxu0
        %745 = vmatprep.mubr.f32.mxu0 0.0
        %746 = vmatmul.mubr.f32.gmra.mrb[0].mxu0 %v208
        %v747 = vpop.f32.mrb[0].mxu0
        %v748 = vadd.f32 0.0, %v747
        %v749 = vpop.f32.mrb[0].mxu0
        %750 = vmatprep.mubr.f32.mxu0 0.0
        %751 = vmatmul.mubr.f32.gmra.mrb[0].mxu0 %v211
        %v752 = vpop.f32.mrb[0].mxu0
        %v753 = vadd.f32 0.0, %v752
        %v754 = vpop.f32.mrb[0].mxu0
        %755 = vmatprep.mubr.f32.mxu0 0.0
        %756 = vmatmul.mubr.f32.gmra.mrb[0].mxu0 %v214
        %v757 = vpop.f32.mrb[0].mxu0
        %v758 = vadd.f32 0.0, %v757
        %v759 = vpop.f32.mrb[0].mxu0
        %760 = vmatprep.mubr.f32.mxu0 0.0
        %761 = vmatmul.mubr.f32.gmra.mrb[0].mxu0 %v217
        %v762 = vpop.f32.mrb[0].mxu0
        %v763 = vadd.f32 0.0, %v762
        %v764 = vpop.f32.mrb[0].mxu0
        %765 = vdwg.mxu0
        %v766 = vld [vmem:[%s2] sm:$0xff]
        %v767 = vld [vmem:[%s2 + $0x8] sm:$0xff]
        %v769 = vsel %vm203, %v743, 0
        %v772 = vsel %vm203, %v748, 0
        %v775 = vsel %vm203, %v753, 0
        %v778 = vsel %vm203, %v758, 0
        %v781 = vsel %vm203, %v763, 0
        %783 = vmatprep.subr.mxu0 0.0
        %784 = vmatpush1.msra.mxu0 %v766
        %785 = vmatprep.subr.mxu0 0.0
        %786 = vmatpush1.msra.mxu0 %v767
        %787 = vmatprep.subr.mxu0 0.0
        %788 = vmatpush1.msra.mxu0 0.0
        %789 = vmatprep.subr.mxu0 0.0
        %790 = vmatpush1.msra.mxu0 0.0
        %791 = vmatprep.subr.mxu0 0.0
        %792 = vmatpush1.msra.mxu0 0.0
        %793 = vmatprep.subr.mxu0 0.0
        %794 = vmatpush1.msra.mxu0 0.0
        %795 = vmatprep.subr.mxu0 0.0
        %796 = vmatpush1.msra.mxu0 0.0
        %797 = vmatprep.subr.mxu0 0.0
        %798 = vmatpush1.msra.mxu0 0.0
        %799 = vmatprep.subr.mxu0 0.0
        %800 = vmatpush1.msra.mxu0 0.0
        %801 = vmatprep.subr.mxu0 0.0
        %802 = vmatpush1.msra.mxu0 0.0
        %803 = vmatprep.subr.mxu0 0.0
        %804 = vmatpush1.msra.mxu0 0.0
        %805 = vmatprep.subr.mxu0 0.0
        %806 = vmatpush1.msra.mxu0 0.0
        %807 = vmatprep.subr.mxu0 0.0
        %808 = vmatpush1.msra.mxu0 0.0
        %809 = vmatprep.subr.mxu0 0.0
        %810 = vmatpush1.msra.mxu0 0.0
        %811 = vmatprep.subr.mxu0 0.0
        %812 = vmatpush1.msra.mxu0 0.0
        %813 = vmatprep.subr.mxu0 0.0
        %814 = vmatpush1.msra.mxu0 0.0
        %815 = vmatprep.subr.mxu0 0.0
        %816 = vmatpush1.msra.mxu0 0.0
        %817 = vmatprep.subr.mxu0 0.0
        %818 = vmatpush1.msra.mxu0 0.0
        %819 = vmatprep.subr.mxu0 0.0
        %820 = vmatpush1.msra.mxu0 0.0
        %821 = vmatprep.subr.mxu0 0.0
        %822 = vmatpush1.msra.mxu0 0.0
        %823 = vmatprep.subr.mxu0 0.0
        %824 = vmatpush1.msra.mxu0 0.0
        %825 = vmatprep.subr.mxu0 0.0
        %826 = vmatpush1.msra.mxu0 0.0
        %827 = vmatprep.subr.mxu0 0.0
        %828 = vmatpush1.msra.mxu0 0.0
        %829 = vmatprep.subr.mxu0 0.0
        %830 = vmatpush1.msra.mxu0 0.0
        %831 = vmatprep.subr.mxu0 0.0
        %832 = vmatpush1.msra.mxu0 0.0
        %833 = vmatprep.subr.mxu0 0.0
        %834 = vmatpush1.msra.mxu0 0.0
        %835 = vmatprep.subr.mxu0 0.0
        %836 = vmatpush1.msra.mxu0 0.0
        %837 = vmatprep.subr.mxu0 0.0
        %838 = vmatpush1.msra.mxu0 0.0
        %839 = vmatprep.subr.mxu0 0.0
        %840 = vmatpush1.msra.mxu0 0.0
        %841 = vmatprep.subr.mxu0 0.0
        %842 = vmatpush1.msra.mxu0 0.0
        %843 = vmatprep.subr.mxu0 0.0
        %844 = vmatpush1.msra.mxu0 0.0
        %845 = vmatprep.subr.mxu0 0.0
        %846 = vmatpush1.msra.mxu0 0.0
        %847 = vmatprep.mubr.f32.mxu0 0.0
        %848 = vmatmul.mubr.f32.gmra.mrb[0].mxu0 %v769
        %v849 = vpop.f32.mrb[0].mxu0
        %v850 = vadd.f32 0.0, %v849
        %v851 = vpop.f32.mrb[0].mxu0
        %852 = vmatprep.mubr.f32.mxu0 0.0
        %853 = vmatmul.mubr.f32.gmra.mrb[0].mxu0 %v772
        %v854 = vpop.f32.mrb[0].mxu0
        %v855 = vadd.f32 0.0, %v854
        %v856 = vpop.f32.mrb[0].mxu0
        %857 = vmatprep.mubr.f32.mxu0 0.0
        %858 = vmatmul.mubr.f32.gmra.mrb[0].mxu0 %v775
        %v859 = vpop.f32.mrb[0].mxu0
        %v860 = vadd.f32 0.0, %v859
        %v861 = vpop.f32.mrb[0].mxu0
        %862 = vmatprep.mubr.f32.mxu0 0.0
        %863 = vmatmul.mubr.f32.gmra.mrb[0].mxu0 %v778
        %v864 = vpop.f32.mrb[0].mxu0
        %v865 = vadd.f32 0.0, %v864
        %v866 = vpop.f32.mrb[0].mxu0
        %867 = vmatprep.mubr.f32.mxu0 0.0
        %868 = vmatmul.mubr.f32.gmra.mrb[0].mxu0 %v781
        %v869 = vpop.f32.mrb[0].mxu0
        %v870 = vadd.f32 0.0, %v869
        %v871 = vpop.f32.mrb[0].mxu0
        %872 = vdwg.mxu0
        %v873 = vsel %vm446, %v850, -1.0
        %v874 = vsel %vm447, %v855, -1.0
        %v875 = vsel %vm448, %v860, -1.0
        %v876 = vsel %vm449, %v865, -1.0
        %v877 = vsel %vm450, %v870, -1.0
        %s878 = scalar_lea.vmem %s194, 80
        %879 = vst.msk [vmem:[%s878] sm:$0xff] %vm456, %v873
        %880 = vst.msk [vmem:[%s878 + $0x8] sm:$0xff] %vm456, %v874
        %881 = vst.msk [vmem:[%s878 + $0x10] sm:$0xff] %vm456, %v875
        %882 = vst.msk [vmem:[%s878 + $0x18] sm:$0xff] %vm456, %v876
        %883 = vst.msk [vmem:[%s878 + $0x20] sm:$0xff] %vm456, %v877
        %s884 = scalar_lea.vmem %s164, 48 [#allocation2]
        %v885 = vld [vmem:[%s884] sm:$0xff]
        %v886 = vld [vmem:[%s884 + $0x8] sm:$0xff]
        %887 = vmatprep.subr.mxu0 0.0
        %888 = vmatpush1.msra.mxu0 %v885
        %889 = vmatprep.subr.mxu0 0.0
        %890 = vmatpush1.msra.mxu0 %v886
        %891 = vmatprep.subr.mxu0 0.0
        %892 = vmatpush1.msra.mxu0 0.0
        %893 = vmatprep.subr.mxu0 0.0
        %894 = vmatpush1.msra.mxu0 0.0
        %895 = vmatprep.subr.mxu0 0.0
        %896 = vmatpush1.msra.mxu0 0.0
        %897 = vmatprep.subr.mxu0 0.0
        %898 = vmatpush1.msra.mxu0 0.0
        %899 = vmatprep.subr.mxu0 0.0
        %900 = vmatpush1.msra.mxu0 0.0
        %901 = vmatprep.subr.mxu0 0.0
        %902 = vmatpush1.msra.mxu0 0.0
        %903 = vmatprep.subr.mxu0 0.0
        %904 = vmatpush1.msra.mxu0 0.0
        %905 = vmatprep.subr.mxu0 0.0
        %906 = vmatpush1.msra.mxu0 0.0
        %907 = vmatprep.subr.mxu0 0.0
        %908 = vmatpush1.msra.mxu0 0.0
        %909 = vmatprep.subr.mxu0 0.0
        %910 = vmatpush1.msra.mxu0 0.0
        %911 = vmatprep.subr.mxu0 0.0
        %912 = vmatpush1.msra.mxu0 0.0
        %913 = vmatprep.subr.mxu0 0.0
        %914 = vmatpush1.msra.mxu0 0.0
        %915 = vmatprep.subr.mxu0 0.0
        %916 = vmatpush1.msra.mxu0 0.0
        %917 = vmatprep.subr.mxu0 0.0
        %918 = vmatpush1.msra.mxu0 0.0
        %919 = vmatprep.subr.mxu0 0.0
        %920 = vmatpush1.msra.mxu0 0.0
        %921 = vmatprep.subr.mxu0 0.0
        %922 = vmatpush1.msra.mxu0 0.0
        %923 = vmatprep.subr.mxu0 0.0
        %924 = vmatpush1.msra.mxu0 0.0
        %925 = vmatprep.subr.mxu0 0.0
        %926 = vmatpush1.msra.mxu0 0.0
        %927 = vmatprep.subr.mxu0 0.0
        %928 = vmatpush1.msra.mxu0 0.0
        %929 = vmatprep.subr.mxu0 0.0
        %930 = vmatpush1.msra.mxu0 0.0
        %931 = vmatprep.subr.mxu0 0.0
        %932 = vmatpush1.msra.mxu0 0.0
        %933 = vmatprep.subr.mxu0 0.0
        %934 = vmatpush1.msra.mxu0 0.0
        %935 = vmatprep.subr.mxu0 0.0
        %936 = vmatpush1.msra.mxu0 0.0
        %937 = vmatprep.subr.mxu0 0.0
        %938 = vmatpush1.msra.mxu0 0.0
        %939 = vmatprep.subr.mxu0 0.0
        %940 = vmatpush1.msra.mxu0 0.0
        %941 = vmatprep.subr.mxu0 0.0
        %942 = vmatpush1.msra.mxu0 0.0
        %943 = vmatprep.subr.mxu0 0.0
        %944 = vmatpush1.msra.mxu0 0.0
        %945 = vmatprep.subr.mxu0 0.0
        %946 = vmatpush1.msra.mxu0 0.0
        %947 = vmatprep.subr.mxu0 0.0
        %948 = vmatpush1.msra.mxu0 0.0
        %949 = vmatprep.subr.mxu0 0.0
        %950 = vmatpush1.msra.mxu0 0.0
        %951 = vmatprep.mubr.f32.mxu0 0.0
        %952 = vmatmul.mubr.f32.gmra.mrb[0].mxu0 %v205
        %v953 = vpop.f32.mrb[0].mxu0
        %v954 = vadd.f32 0.0, %v953
        %v955 = vpop.f32.mrb[0].mxu0
        %956 = vmatprep.mubr.f32.mxu0 0.0
        %957 = vmatmul.mubr.f32.gmra.mrb[0].mxu0 %v208
        %v958 = vpop.f32.mrb[0].mxu0
        %v959 = vadd.f32 0.0, %v958
        %v960 = vpop.f32.mrb[0].mxu0
        %961 = vmatprep.mubr.f32.mxu0 0.0
        %962 = vmatmul.mubr.f32.gmra.mrb[0].mxu0 %v211
        %v963 = vpop.f32.mrb[0].mxu0
        %v964 = vadd.f32 0.0, %v963
        %v965 = vpop.f32.mrb[0].mxu0
        %966 = vmatprep.mubr.f32.mxu0 0.0
        %967 = vmatmul.mubr.f32.gmra.mrb[0].mxu0 %v214
        %v968 = vpop.f32.mrb[0].mxu0
        %v969 = vadd.f32 0.0, %v968
        %v970 = vpop.f32.mrb[0].mxu0
        %971 = vmatprep.mubr.f32.mxu0 0.0
        %972 = vmatmul.mubr.f32.gmra.mrb[0].mxu0 %v217
        %v973 = vpop.f32.mrb[0].mxu0
        %v974 = vadd.f32 0.0, %v973
        %v975 = vpop.f32.mrb[0].mxu0
        %976 = vdwg.mxu0
        %v977 = vld [vmem:[%s2] sm:$0xff]
        %v978 = vld [vmem:[%s2 + $0x8] sm:$0xff]
        %v980 = vsel %vm203, %v954, 0
        %v983 = vsel %vm203, %v959, 0
        %v986 = vsel %vm203, %v964, 0
        %v989 = vsel %vm203, %v969, 0
        %v992 = vsel %vm203, %v974, 0
        %994 = vmatprep.subr.mxu0 0.0
        %995 = vmatpush1.msra.mxu0 %v977
        %996 = vmatprep.subr.mxu0 0.0
        %997 = vmatpush1.msra.mxu0 %v978
        %998 = vmatprep.subr.mxu0 0.0
        %999 = vmatpush1.msra.mxu0 0.0
        %1000 = vmatprep.subr.mxu0 0.0
        %1001 = vmatpush1.msra.mxu0 0.0
        %1002 = vmatprep.subr.mxu0 0.0
        %1003 = vmatpush1.msra.mxu0 0.0
        %1004 = vmatprep.subr.mxu0 0.0
        %1005 = vmatpush1.msra.mxu0 0.0
        %1006 = vmatprep.subr.mxu0 0.0
        %1007 = vmatpush1.msra.mxu0 0.0
        %1008 = vmatprep.subr.mxu0 0.0
        %1009 = vmatpush1.msra.mxu0 0.0
        %1010 = vmatprep.subr.mxu0 0.0
        %1011 = vmatpush1.msra.mxu0 0.0
        %1012 = vmatprep.subr.mxu0 0.0
        %1013 = vmatpush1.msra.mxu0 0.0
        %1014 = vmatprep.subr.mxu0 0.0
        %1015 = vmatpush1.msra.mxu0 0.0
        %1016 = vmatprep.subr.mxu0 0.0
        %1017 = vmatpush1.msra.mxu0 0.0
        %1018 = vmatprep.subr.mxu0 0.0
        %1019 = vmatpush1.msra.mxu0 0.0
        %1020 = vmatprep.subr.mxu0 0.0
        %1021 = vmatpush1.msra.mxu0 0.0
        %1022 = vmatprep.subr.mxu0 0.0
        %1023 = vmatpush1.msra.mxu0 0.0
        %1024 = vmatprep.subr.mxu0 0.0
        %1025 = vmatpush1.msra.mxu0 0.0
        %1026 = vmatprep.subr.mxu0 0.0
        %1027 = vmatpush1.msra.mxu0 0.0
        %1028 = vmatprep.subr.mxu0 0.0
        %1029 = vmatpush1.msra.mxu0 0.0
        %1030 = vmatprep.subr.mxu0 0.0
        %1031 = vmatpush1.msra.mxu0 0.0
        %1032 = vmatprep.subr.mxu0 0.0
        %1033 = vmatpush1.msra.mxu0 0.0
        %1034 = vmatprep.subr.mxu0 0.0
        %1035 = vmatpush1.msra.mxu0 0.0
        %1036 = vmatprep.subr.mxu0 0.0
        %1037 = vmatpush1.msra.mxu0 0.0
        %1038 = vmatprep.subr.mxu0 0.0
        %1039 = vmatpush1.msra.mxu0 0.0
        %1040 = vmatprep.subr.mxu0 0.0
        %1041 = vmatpush1.msra.mxu0 0.0
        %1042 = vmatprep.subr.mxu0 0.0
        %1043 = vmatpush1.msra.mxu0 0.0
        %1044 = vmatprep.subr.mxu0 0.0
        %1045 = vmatpush1.msra.mxu0 0.0
        %1046 = vmatprep.subr.mxu0 0.0
        %1047 = vmatpush1.msra.mxu0 0.0
        %1048 = vmatprep.subr.mxu0 0.0
        %1049 = vmatpush1.msra.mxu0 0.0
        %1050 = vmatprep.subr.mxu0 0.0
        %1051 = vmatpush1.msra.mxu0 0.0
        %1052 = vmatprep.subr.mxu0 0.0
        %1053 = vmatpush1.msra.mxu0 0.0
        %1054 = vmatprep.subr.mxu0 0.0
        %1055 = vmatpush1.msra.mxu0 0.0
        %1056 = vmatprep.subr.mxu0 0.0
        %1057 = vmatpush1.msra.mxu0 0.0
        %1058 = vmatprep.mubr.f32.mxu0 0.0
        %1059 = vmatmul.mubr.f32.gmra.mrb[0].mxu0 %v980
        %v1060 = vpop.f32.mrb[0].mxu0
        %v1061 = vadd.f32 0.0, %v1060
        %v1062 = vpop.f32.mrb[0].mxu0
        %1063 = vmatprep.mubr.f32.mxu0 0.0
        %1064 = vmatmul.mubr.f32.gmra.mrb[0].mxu0 %v983
        %v1065 = vpop.f32.mrb[0].mxu0
        %v1066 = vadd.f32 0.0, %v1065
        %v1067 = vpop.f32.mrb[0].mxu0
        %1068 = vmatprep.mubr.f32.mxu0 0.0
        %1069 = vmatmul.mubr.f32.gmra.mrb[0].mxu0 %v986
        %v1070 = vpop.f32.mrb[0].mxu0
        %v1071 = vadd.f32 0.0, %v1070
        %v1072 = vpop.f32.mrb[0].mxu0
        %1073 = vmatprep.mubr.f32.mxu0 0.0
        %1074 = vmatmul.mubr.f32.gmra.mrb[0].mxu0 %v989
        %v1075 = vpop.f32.mrb[0].mxu0
        %v1076 = vadd.f32 0.0, %v1075
        %v1077 = vpop.f32.mrb[0].mxu0
        %1078 = vmatprep.mubr.f32.mxu0 0.0
        %1079 = vmatmul.mubr.f32.gmra.mrb[0].mxu0 %v992
        %v1080 = vpop.f32.mrb[0].mxu0
        %v1081 = vadd.f32 0.0, %v1080
        %v1082 = vpop.f32.mrb[0].mxu0
        %1083 = vdwg.mxu0
        %v1084 = vsel %vm446, %v1061, -1.0
        %v1085 = vsel %vm447, %v1066, -1.0
        %v1086 = vsel %vm448, %v1071, -1.0
        %v1087 = vsel %vm449, %v1076, -1.0
        %v1088 = vsel %vm450, %v1081, -1.0
        %s1089 = scalar_lea.vmem %s194, 120
        %1090 = vst.msk [vmem:[%s1089] sm:$0xff] %vm456, %v1084
        %1091 = vst.msk [vmem:[%s1089 + $0x8] sm:$0xff] %vm456, %v1085
        %1092 = vst.msk [vmem:[%s1089 + $0x10] sm:$0xff] %vm456, %v1086
        %1093 = vst.msk [vmem:[%s1089 + $0x18] sm:$0xff] %vm456, %v1087
        %1094 = vst.msk [vmem:[%s1089 + $0x20] sm:$0xff] %vm456, %v1088
        %s1095 = smul.u32 4, %s17
        %p1096 = scmp.lt.s32.totalorder %s1095, 7
        %s1097 = scalar_select %p1096, %s1095, 7
        %s1098 = smul.addr %s1097, 5
        %s1099 = smul.addr %s1098, 8
        %s1100 = scalar_lea.vmem %s3, %s1099
        // Predicated region
        $region37: #{tpu_custom_call.1} parent=31 // pred_check
          %p1101 = pneg %p103
        $region38: #{tpu_custom_call.1} parent=31 // pred_check_branch
          %1103 = sbr.rel (%p1101) target = $region40
        $region39: #{tpu_custom_call.1} parent=31 // pred_region
          %s1104 = smul.u32 4, %s17
        $region40: #{tpu_custom_call.1} parent=31 // pred_fallthru
          _
      $region32: #{tpu_custom_call.1} parent=5 // pred_fallthru
        _
      %p1105 = scmp.le.s32.totalorder 2, %s12
      // Predicated region
      $region41: #{tpu_custom_call.1} parent=5 // pred_check
        %p1106 = pneg %p1105
      $region42: #{tpu_custom_call.1} parent=5 // pred_check_branch
        %1108 = sbr.rel (%p1106) target = $region44
      $region43: #{tpu_custom_call.1} parent=5 // pred_region
        %s1109 = ssub.s32 %s12, 2
        // Predicated region
        $region45: #{tpu_custom_call.1} parent=43 // pred_check
          %p1110 = pneg %p109
        $region46: #{tpu_custom_call.1} parent=43 // pred_check_branch
          %1112 = sbr.rel (%p1110) target = $region48
        $region47: #{tpu_custom_call.1} parent=43 // pred_region
          %s1113 = smul.u32 4, %s18
          %p1114 = scmp.lt.s32.totalorder %s1113, 7
          %s1115 = scalar_select %p1114, %s1113, 7
          %s1116 = smul.addr %s1115, 5
          %s1117 = smul.addr %s1116, 8
          %s1118 = scalar_lea.vmem %s3, %s1117
        $region48: #{tpu_custom_call.1} parent=43 // pred_fallthru
          _
      $region44: #{tpu_custom_call.1} parent=5 // pred_fallthru
        _
    $region6: #{tpu_custom_call.1} parent=1 // loop_footer
      %s16 = sadd.s32 1, %s12
    $region7: #{tpu_custom_call.1} parent=1 // loop_footer_branch
      %11 = sbr.rel target = $region3
    $region8: #{tpu_custom_call.1} parent=1 // loop_exit
      _
    %1119 = vsyncpa [#allocation3], 1
    %s1120 = scalar_lea.sflag [#allocation3], 1
    %1121 = vsyncpa %s1120, 1

</llo_original>
